<compile_context>
chip_gen: v7x
topology: tpu7x:2x2x1
jax: 0.10.0
libtpu: 0.0.40
codegen_flags: <defaults>
</compile_context>

<pallas_src>
import jax
import jax.numpy as jnp
from jax.experimental import pallas as pl
from jax.experimental.pallas import tpu as pltpu


def _round_up(x, m):
    return (x + m - 1) // m * m


def inception_kernel(x_ref, w_ref, b_ref, o_ref):
    # x_ref : (m_tile, 5*Dp)  im2col rows, bf16
    # w_ref : (5*Dp, 3*Cp)    fused [conv5 | conv3 | conv1] weights, bf16
    # b_ref : (1, 3*Cp)       fused biases, f32
    # o_ref : (m_tile, Cp)    f32
    acc = jnp.dot(x_ref[...], w_ref[...], preferred_element_type=jnp.float32)
    y = jnp.tanh(acc + b_ref[...])  # f32 epilogue (v5e VPU/EUP have no bf16)
    c = o_ref.shape[-1]
    # concat-along-width + max_pool2d(kernel=(1,3)) == elementwise max of the
    # three lane-aligned channel groups.
    o_ref[...] = jnp.maximum(
        jnp.maximum(y[:, :c], y[:, c:2 * c]), y[:, 2 * c:3 * c]
    ).astype(o_ref.dtype)


def inception_cnn(x, w1, w3, w5, b1, b3, b5, *, m_tile=256,
                  compute_dtype=jnp.bfloat16):
    """x: (B, S, D) f32; wK: (K, D, C); bK: (1, C)  ->  (B, S, C) f32."""
    B, S, D = x.shape
    C = w1.shape[-1]
    Dp = _round_up(D, 128)
    Cp = _round_up(C, 128)
    K = 5 * Dp          # contraction dim of the fused im2col matmul
    N = 3 * Cp          # conv5 | conv3 | conv1 channel groups

    # ---- im2col (layout plumbing in the wrapper): pad seq by 2 on each side,
    # pad D -> Dp, stack the 5 taps along the lane/contraction axis. ----
    xpad = jnp.zeros((B, S + 4, Dp), x.dtype).at[:, 2:S + 2, :D].set(x)
    xcol = jnp.concatenate([xpad[:, j:j + S, :] for j in range(5)], axis=-1)
    xcol = xcol.reshape(B * S, K)

    M = B * S
    m_tile = min(m_tile, _round_up(M, 8))
    Mp = _round_up(M, m_tile)
    if Mp != M:
        xcol = jnp.pad(xcol, ((0, Mp - M), (0, 0)))
    xcol = xcol.astype(compute_dtype)

    # ---- fused weight (5*Dp, 3*Cp): tap j of the padded window contributes
    #  conv_5: taps 0..4,  conv_3: taps 1..3,  conv_1: tap 2. ----
    wbig = jnp.zeros((5, Dp, N), jnp.float32)
    wbig = wbig.at[:, :D, 0:C].set(w5)
    wbig = wbig.at[1:4, :D, Cp:Cp + C].set(w3)
    wbig = wbig.at[2:3, :D, 2 * Cp:2 * Cp + C].set(w1)
    wbig = wbig.reshape(K, N).astype(compute_dtype)

    bbig = jnp.zeros((1, N), jnp.float32)
    bbig = bbig.at[:, 0:C].set(b5)
    bbig = bbig.at[:, Cp:Cp + C].set(b3)
    bbig = bbig.at[:, 2 * Cp:2 * Cp + C].set(b1)

    out = pl.pallas_call(
        inception_kernel,
        out_shape=jax.ShapeDtypeStruct((Mp, Cp), jnp.float32),
        grid_spec=pltpu.PrefetchScalarGridSpec(
            num_scalar_prefetch=0,
            grid=(Mp // m_tile,),
            in_specs=[
                pl.BlockSpec((m_tile, K), lambda i: (i, 0)),
                pl.BlockSpec((K, N), lambda i: (0, 0)),   # weights stay resident
                pl.BlockSpec((1, N), lambda i: (0, 0)),
            ],
            out_specs=pl.BlockSpec((m_tile, Cp), lambda i: (i, 0)),
        ),
        compiler_params=pltpu.CompilerParams(
            dimension_semantics=("parallel",),
        ),
    )(xcol, wbig, bbig)

    return out[:M, :C].reshape(B, S, C)


def reference(x, w1, w3, w5, b1, b3, b5, *, compute_dtype=jnp.bfloat16):
    """Pure-JAX reference matching the PyTorch forward (bf16-rounded inputs,
    f32 accumulation, to mirror the kernel's MXU path)."""
    B, S, D = x.shape
    xr = x.astype(compute_dtype).astype(jnp.float32)
    xpad = jnp.pad(xr, ((0, 0), (2, 2), (0, 0)))

    def conv_tanh(w, b, k, off):
        wr = w.astype(compute_dtype).astype(jnp.float32)
        acc = jnp.broadcast_to(b, (B, S, w.shape[-1])).astype(jnp.float32)
        for j in range(k):
            acc = acc + jnp.einsum(
                "bsd,dc->bsc", xpad[:, off + j: off + j + S, :], wr[j],
                precision=jax.lax.Precision.HIGHEST)
        return jnp.tanh(acc)

    y1 = conv_tanh(w1, b1, 1, 2)
    y3 = conv_tanh(w3, b3, 3, 1)
    y5 = conv_tanh(w5, b5, 5, 0)
    return jnp.maximum(jnp.maximum(y1, y3), y5)


if __name__ == "__main__":
    # Small shapes; S chosen so B*S > one M-tile (exercises the tiled grid and
    # the D/C lane padding paths).  D and C are NOT multiples of 128 on purpose.
    B, S, D, C = 4, 72, 32, 48
    key = jax.random.PRNGKey(0)
    ks = jax.random.split(key, 7)
    scale = 1.0 / jnp.sqrt(jnp.float32(D))

    x = jax.random.normal(ks[0], (B, S, D), jnp.float32)
    w1 = jax.random.normal(ks[1], (1, D, C), jnp.float32) * scale
    w3 = jax.random.normal(ks[2], (3, D, C), jnp.float32) * scale
    w5 = jax.random.normal(ks[3], (5, D, C), jnp.float32) * scale
    b1 = jax.random.normal(ks[4], (1, C), jnp.float32) * 0.1
    b3 = jax.random.normal(ks[5], (1, C), jnp.float32) * 0.1
    b5 = jax.random.normal(ks[6], (1, C), jnp.float32) * 0.1

    out = inception_cnn(x, w1, w3, w5, b1, b3, b5)
    jax.block_until_ready(out)

    ref = reference(x, w1, w3, w5, b1, b3, b5)
    assert out.shape == (B, S, C), out.shape
    assert jnp.allclose(out, ref, atol=2e-3, rtol=2e-3), "mismatch vs reference"

    # TODO(synk): inception_mode 0 (identity) and 2 (single 3-wide conv) paths
    # are trivial specializations and are not kernelized here (mode=1 only).
    print("KERNEL_OK")
</pallas_src>

<mosaic_0001>
module attributes {stable_mosaic.version = 11 : i64} {
  func.func @inception_kernel(%arg0: i32, %arg1: memref<256x640xbf16, #tpu.memory_space<vmem>>, %arg2: memref<640x384xbf16, #tpu.memory_space<vmem>>, %arg3: memref<1x384xf32, #tpu.memory_space<vmem>>, %arg4: memref<256x128xf32, #tpu.memory_space<vmem>>) attributes {dimension_semantics = [#tpu.dimension_semantics<parallel>], iteration_bounds = array<i64: 2>, scalar_prefetch = 0 : i64, scratch_operands = 0 : i64, tpu.core_type = #tpu.core_type<tc>, window_params = [{transform_indices = @transform_0, window_bounds = array<i64: 256, 640>}, {pipeline_mode = #tpu.pipeline_mode<synchronous>, transform_indices = @transform_1, window_bounds = array<i64: 640, 384>}, {pipeline_mode = #tpu.pipeline_mode<synchronous>, transform_indices = @transform_2, window_bounds = array<i64: 1, 384>}, {transform_indices = @transform_3, window_bounds = array<i64: 256, 128>}]} {
    %c0 = arith.constant 0 : index
    %c0_0 = arith.constant 0 : index
    %0 = vector.load %arg1[%c0, %c0_0] : memref<256x640xbf16, #tpu.memory_space<vmem>>, vector<256x640xbf16>
    %c0_1 = arith.constant 0 : index
    %c0_2 = arith.constant 0 : index
    %1 = vector.load %arg2[%c0_1, %c0_2] : memref<640x384xbf16, #tpu.memory_space<vmem>>, vector<640x384xbf16>
    %cst = arith.constant dense<0.000000e+00> : vector<256x384xf32>
    %2 = tpu.matmul %0, %1, %cst {dimension_numbers = #tpu.dot_dimension_numbers<[1], [0], [0], [1], [0, 0, 1, 1], [], []>} : vector<256x640xbf16>, vector<640x384xbf16>, vector<256x384xf32> -> vector<256x384xf32>
    %c0_3 = arith.constant 0 : index
    %c0_4 = arith.constant 0 : index
    %3 = vector.load %arg3[%c0_3, %c0_4] : memref<1x384xf32, #tpu.memory_space<vmem>>, vector<1x384xf32>
    %4 = vector.broadcast %3 : vector<1x384xf32> to vector<256x384xf32>
    %5 = arith.addf %2, %4 : vector<256x384xf32>
    %6 = math.tanh %5 : vector<256x384xf32>
    %7 = vector.extract_strided_slice %6 {offsets = [0, 0], sizes = [256, 128], strides = [1, 1]} : vector<256x384xf32> to vector<256x128xf32>
    %8 = vector.extract_strided_slice %6 {offsets = [0, 128], sizes = [256, 128], strides = [1, 1]} : vector<256x384xf32> to vector<256x128xf32>
    %9 = arith.maximumf %7, %8 : vector<256x128xf32>
    %10 = vector.extract_strided_slice %6 {offsets = [0, 256], sizes = [256, 128], strides = [1, 1]} : vector<256x384xf32> to vector<256x128xf32>
    %11 = arith.maximumf %9, %10 : vector<256x128xf32>
    %c0_5 = arith.constant 0 : index
    %c0_6 = arith.constant 0 : index
    %12 = vector.load %arg4[%c0_5, %c0_6] : memref<256x128xf32, #tpu.memory_space<vmem>>, vector<256x128xf32>
    tpu.vector_store %arg4[%c0_5, %c0_6], %11 {strides = array<i32>} : memref<256x128xf32, #tpu.memory_space<vmem>>, vector<256x128xf32>,
    return
  }
  func.func @transform_0(%arg0: i32) -> (i32, i32) {
    %c0_i32 = arith.constant 0 : i32
    %c0_i32_0 = arith.constant 0 : i32
    return %arg0, %c0_i32 : i32, i32
  }
  func.func @transform_1(%arg0: i32) -> (i32, i32) {
    %c0_i32 = arith.constant 0 : i32
    %c0_i32_0 = arith.constant 0 : i32
    %c0_i32_1 = arith.constant 0 : i32
    return %c0_i32, %c0_i32_0 : i32, i32
  }
  func.func @transform_2(%arg0: i32) -> (i32, i32) {
    %c0_i32 = arith.constant 0 : i32
    %c0_i32_0 = arith.constant 0 : i32
    %c0_i32_1 = arith.constant 0 : i32
    return %c0_i32, %c0_i32_0 : i32, i32
  }
  func.func @transform_3(%arg0: i32) -> (i32, i32) {
    %c0_i32 = arith.constant 0 : i32
    %c0_i32_0 = arith.constant 0 : i32
    return %arg0, %c0_i32 : i32, i32
  }
}

</mosaic_0001>

<llo_original>
// kernel: tpu_custom_call.1
$region0: #{tpu_custom_call.1}
  #allocation0 [shape = 'u32[]', space=smem, size = 0x4, offset = 0x4, fixed_abs, tag = 'smem constant byte address 0x4 - core index']
  #allocation1 [shape = 'u32[144,128]{1,0:T(1,128)}', space=vmem, size = 0x12000, scoped, tag = 'internal scratch']
  %s0 = inlined_call_operand.hbm [shape: bf16[512,640], index: 0, kind: input, shape index: {}]
  %s1 = inlined_call_operand.hbm [shape: bf16[640,384], index: 1, kind: input, shape index: {}]
  %s2 = inlined_call_operand.vmem [shape: f32[1,384], index: 2, kind: input, shape index: {}]
  %s3 = inlined_call_operand.hbm [shape: f32[512,128], index: 3, kind: output, shape index: {}]
  %s4 = sld [smem:[#allocation0]]
  $region53: #{tpu_custom_call.1} parent=0
    _
  %s6 = ssub.s32 1, %s4
  %s7 = scalar_select 0, %s6, %s4
  $region1: #{tpu_custom_call.1} parent=0
    #allocation2 [shape = 'u8[655360]{0}', space=vmem, size = 0xa0000, scoped, tag = 'input window, operand 0']
    #allocation3 [shape = 's32[2]{0}', space=sflag, size = 0x8, scoped, tag = 'scoped memory for tpu_custom_call.1']
    #allocation4 [shape = 's32[2]{0}', space=sflag, size = 0x8, scoped, tag = 'scoped memory for tpu_custom_call.1']
    #allocation5 [shape = 'u8[491520]{0}', space=vmem, size = 0x78000, scoped, tag = 'input window, operand 1, single buffered']
    #allocation6 [shape = 's32[1]{0}', space=sflag, size = 0x4, scoped, tag = 'scoped memory for tpu_custom_call.1']
    #allocation7 [shape = 'u8[262144]{0}', space=vmem, size = 0x40000, scoped, tag = 'output window, operand 0']
    %8 = vsyncpa [#allocation3], 0
    %s9 = scalar_lea.sflag [#allocation3], 1
    %10 = vsyncpa %s9, 0
    %11 = vsyncpa [#allocation6], 0
    %12 = vsyncpa [#allocation4], 0
    %s13 = scalar_lea.sflag [#allocation4], 1
    %14 = vsyncpa %s13, 0
    loop: start=0, step=1, limit=4
    $region2: #{tpu_custom_call.1} parent=1 // loop_pre_header
      _
    $region3: #{tpu_custom_call.1} parent=1 // loop_header
      %s16 = sphi 0, %s20
      %p17 = scmp.ge.s32.totalorder %s16, 4
      %s26 = sphi 0, %s28
      %s29 = sphi 0, %s26
      %s30 = sphi 0, %s29
      %s46 = sphi 0, %s30
      %s50 = sphi 0, %s50
      %s52 = sphi 0, %s50
      %s53 = sphi 0, %s52
      %s67 = sphi 0, %s53
      %s71 = sphi 0, %s71
      %s73 = sphi 0, %s71
      %s74 = sphi 0, %s73
      %s88 = sphi 0, %s74
      %s94 = sphi 0, %s96
      %s97 = sphi 0, %s94
      %s98 = sphi 0, %s97
      %s114 = sphi 0, %s98
    $region4: #{tpu_custom_call.1} parent=1 // loop_header_branch
      %19 = sbr.rel (%p17) target = $region8
    $region5: #{tpu_custom_call.1} parent=1 // loop_body
      %s21 = ssub.s32 %s16, 1
      %s22 = ssub.s32 %s16, 2
      %s23 = sadd.s32 %s16, 1
      %s24 = ssub.s32 %s16, %s23
      %p25 = scmp.eq.s32.totalorder %s24, 0
      %s27 = sadd.s32 %s26, 1
      %s28 = scalar_select %p25, %s26, %s27
      %p31 = pneg %p25
      %p32 = scmp.eq.s32.totalorder %s16, 1
      %p33 = por %p31, %p32
      %p34 = scmp.ne.s32.totalorder %s26, %s29
      %p35 = scmp.eq.s32.totalorder %s16, 0
      %p36 = por %p34, %p35
      %p37 = scmp.ne.s32.totalorder %s26, %s29
      %p38 = scmp.eq.s32.totalorder %s21, 1
      %p39 = por %p37, %p38
      %p40 = scmp.ne.s32.totalorder %s29, %s30
      %p41 = scmp.eq.s32.totalorder %s21, 0
      %p42 = por %p40, %p41
      %p43 = scmp.ne.s32.totalorder %s29, %s30
      %p44 = scmp.eq.s32.totalorder %s22, 1
      %p45 = por %p43, %p44
      %p47 = scmp.ne.s32.totalorder %s30, %s46
      %p48 = scmp.eq.s32.totalorder %s22, 0
      %p49 = por %p47, %p48
      %s51 = sadd.s32 %s50, 1
      %p54 = scmp.eq.s32.totalorder %s16, 1
      %p55 = scmp.ne.s32.totalorder %s50, %s52
      %p56 = scmp.eq.s32.totalorder %s16, 0
      %p57 = por %p55, %p56
      %p58 = scmp.ne.s32.totalorder %s50, %s52
      %p59 = scmp.eq.s32.totalorder %s21, 1
      %p60 = por %p58, %p59
      %p61 = scmp.ne.s32.totalorder %s52, %s53
      %p62 = scmp.eq.s32.totalorder %s21, 0
      %p63 = por %p61, %p62
      %p64 = scmp.ne.s32.totalorder %s52, %s53
      %p65 = scmp.eq.s32.totalorder %s22, 1
      %p66 = por %p64, %p65
      %p68 = scmp.ne.s32.totalorder %s53, %s67
      %p69 = scmp.eq.s32.totalorder %s22, 0
      %p70 = por %p68, %p69
      %s72 = sadd.s32 %s71, 1
      %p75 = scmp.eq.s32.totalorder %s16, 1
      %p76 = scmp.ne.s32.totalorder %s71, %s73
      %p77 = scmp.eq.s32.totalorder %s16, 0
      %p78 = por %p76, %p77
      %p79 = scmp.ne.s32.totalorder %s71, %s73
      %p80 = scmp.eq.s32.totalorder %s21, 1
      %p81 = por %p79, %p80
      %p82 = scmp.ne.s32.totalorder %s73, %s74
      %p83 = scmp.eq.s32.totalorder %s21, 0
      %p84 = por %p82, %p83
      %p85 = scmp.ne.s32.totalorder %s73, %s74
      %p86 = scmp.eq.s32.totalorder %s22, 1
      %p87 = por %p85, %p86
      %p89 = scmp.ne.s32.totalorder %s74, %s88
      %p90 = scmp.eq.s32.totalorder %s22, 0
      %p91 = por %p89, %p90
      %s92 = ssub.s32 %s16, %s23
      %p93 = scmp.eq.s32.totalorder %s92, 0
      %s95 = sadd.s32 %s94, 1
      %s96 = scalar_select %p93, %s94, %s95
      %p99 = pneg %p93
      %p100 = scmp.eq.s32.totalorder %s16, 1
      %p101 = por %p99, %p100
      %p102 = scmp.ne.s32.totalorder %s94, %s97
      %p103 = scmp.eq.s32.totalorder %s16, 0
      %p104 = por %p102, %p103
      %p105 = scmp.ne.s32.totalorder %s94, %s97
      %p106 = scmp.eq.s32.totalorder %s21, 1
      %p107 = por %p105, %p106
      %p108 = scmp.ne.s32.totalorder %s97, %s98
      %p109 = scmp.eq.s32.totalorder %s21, 0
      %p110 = por %p108, %p109
      %p111 = scmp.ne.s32.totalorder %s97, %s98
      %p112 = scmp.eq.s32.totalorder %s22, 1
      %p113 = por %p111, %p112
      %p115 = scmp.ne.s32.totalorder %s98, %s114
      %p116 = scmp.eq.s32.totalorder %s22, 0
      %p117 = por %p115, %p116
      %p118 = scmp.le.s32.totalorder 1, %s16
      %p119 = scmp.lt.s32.totalorder %s16, 3
      %p120 = pnand %p118, %p119
      %p121 = pneg %p120
      // Predicated region
      $region9: #{tpu_custom_call.1} parent=5 // pred_check
        _
      $region10: #{tpu_custom_call.1} parent=5 // pred_check_branch
        %123 = sbr.rel (%p120) target = $region12
      $region11: #{tpu_custom_call.1} parent=5 // pred_region
        %s124 = ssub.s32 %s16, 1
        // Predicated region
        $region13: #{tpu_custom_call.1} parent=11 // pred_check
          %p125 = pneg %p63
        $region14: #{tpu_custom_call.1} parent=11 // pred_check_branch
          %127 = sbr.rel (%p125) target = $region16
        $region15: #{tpu_custom_call.1} parent=11 // pred_region
          %s129 = ssub.s32 15360, 15360
          %130 = vsyncadd [#allocation6], %s129
          %s131 = sshll.u32 [#allocation5], 4
          %s132 = int_to_ptr.vmem [resolvable:$true] %s131
          %137 = dma.hbm_to_vmem [thread:$0]  %s1, 15360, %s132, [#allocation6], 192, 192, 12
        $region16: #{tpu_custom_call.1} parent=11 // pred_fallthru
          _
        // Predicated region
        $region17: #{tpu_custom_call.1} parent=11 // pred_check
          %p138 = pneg %p84
        $region18: #{tpu_custom_call.1} parent=11 // pred_check_branch
          %140 = sbr.rel (%p138) target = $region20
        $region19: #{tpu_custom_call.1} parent=11 // pred_region
          _
        $region20: #{tpu_custom_call.1} parent=11 // pred_fallthru
          _
      $region12: #{tpu_custom_call.1} parent=5 // pred_fallthru
        _
      %p141 = scmp.lt.s32.totalorder %s16, 2
      // Predicated region
      $region21: #{tpu_custom_call.1} parent=5 // pred_check
        %p142 = pneg %p141
      $region22: #{tpu_custom_call.1} parent=5 // pred_check_branch
        %144 = sbr.rel (%p142) target = $region24
      $region23: #{tpu_custom_call.1} parent=5 // pred_region
        // Predicated region
        $region25: #{tpu_custom_call.1} parent=23 // pred_check
          %p145 = pneg %p36
        $region26: #{tpu_custom_call.1} parent=23 // pred_check_branch
          %147 = sbr.rel (%p145) target = $region28
        $region27: #{tpu_custom_call.1} parent=23 // pred_region
          %s148 = sand.u32 %s26, 1
          %s149 = scalar_lea.sflag [#allocation3], %s148
          %s150 = sand.u32 %s26, 1
          %s151 = smul.addr %s150, 640
          %s152 = scalar_lea.vmem [#allocation2], %s151
          %s153 = smul.u32 32, %s16
          %s155 = ssub.s32 10240, 10240
          %156 = vsyncadd %s149, %s155
          %s157 = smul.addr %s153, 5
          %s158 = smul.addr %s157, 64
          %s159 = scalar_lea.hbm %s0, %s158
          %s160 = sshll.u32 %s152, 4
          %s161 = int_to_ptr.vmem [resolvable:$true] %s160
          %166 = dma.hbm_to_vmem [thread:$0]  %s159, 10240, %s161, %s149, 320, 320, 20
        $region28: #{tpu_custom_call.1} parent=23 // pred_fallthru
          _
      $region24: #{tpu_custom_call.1} parent=5 // pred_fallthru
        _
      %p167 = scmp.le.s32.totalorder 1, %s16
      %p168 = scmp.lt.s32.totalorder %s16, 3
      %p169 = pnand %p167, %p168
      %p170 = pneg %p169
      // Predicated region
      $region29: #{tpu_custom_call.1} parent=5 // pred_check
        _
      $region30: #{tpu_custom_call.1} parent=5 // pred_check_branch
        %172 = sbr.rel (%p169) target = $region32
      $region31: #{tpu_custom_call.1} parent=5 // pred_region
        %s173 = ssub.s32 %s16, 1
        %s174 = sand.u32 %s29, 1
        %s175 = scalar_lea.sflag [#allocation3], %s174
        %s176 = sand.u32 %s29, 1
        %s177 = smul.addr %s176, 640
        %s178 = scalar_lea.vmem [#allocation2], %s177
        // Predicated region
        $region33: #{tpu_custom_call.1} parent=31 // pred_check
          %p179 = pneg %p42
        $region34: #{tpu_custom_call.1} parent=31 // pred_check_branch
          %181 = sbr.rel (%p179) target = $region36
        $region35: #{tpu_custom_call.1} parent=31 // pred_region
          %182 = dma.done %s175, 10240
        $region36: #{tpu_custom_call.1} parent=31 // pred_fallthru
          _
        // Predicated region
        $region37: #{tpu_custom_call.1} parent=31 // pred_check
          %p183 = pneg %p63
        $region38: #{tpu_custom_call.1} parent=31 // pred_check_branch
          %185 = sbr.rel (%p183) target = $region40
        $region39: #{tpu_custom_call.1} parent=31 // pred_region
          %186 = dma.done [#allocation6], 15360
        $region40: #{tpu_custom_call.1} parent=31 // pred_fallthru
          _
        %s187 = sand.u32 %s29, 1
        %s188 = scalar_lea.sflag [#allocation3], %s187
        %s189 = sand.u32 %s29, 1
        %s190 = smul.addr %s189, 640
        %s191 = scalar_lea.vmem [#allocation2], %s190
        %p192 = pneg %p42
        %p193 = pneg %p39
        %p194 = pneg %p63
        %p195 = pneg %p60
        %p196 = pneg %p84
        %p197 = pneg %p81
        %p198 = pneg %p110
        %p199 = pneg %p107
        %s200 = sand.u32 %s97, 1
        %s201 = scalar_lea.sflag [#allocation4], %s200
        %s202 = sand.u32 %s97, 1
        %s203 = smul.addr %s202, 256
        %s204 = scalar_lea.vmem [#allocation7], %s203
        %s205 = smul.u32 32, %s21
        %s206 = smul.u32 32, %s21
        %v208 = vld [vmem:[%s178] sm:$0xff]
        %v209 = vld [vmem:[%s178 + $0x8] sm:$0xff]
        %v210 = vld [vmem:[%s178 + $0x10] sm:$0xf]
        %v211 = vld [vmem:[%s178 + $0x14] sm:$0xff]
        %v212 = vld [vmem:[%s178 + $0x1c] sm:$0xff]
        %v213 = vld [vmem:[%s178 + $0x24] sm:$0xf]
        %v214 = vld [vmem:[%s178 + $0x28] sm:$0xff]
        %v215 = vld [vmem:[%s178 + $0x30] sm:$0xff]
        %v216 = vld [vmem:[%s178 + $0x38] sm:$0xf]
        %v217 = vld [vmem:[%s178 + $0x3c] sm:$0xff]
        %v218 = vld [vmem:[%s178 + $0x44] sm:$0xff]
        %v219 = vld [vmem:[%s178 + $0x4c] sm:$0xf]
        %v220 = vld [vmem:[%s178 + $0x50] sm:$0xff]
        %v221 = vld [vmem:[%s178 + $0x58] sm:$0xff]
        %v222 = vld [vmem:[%s178 + $0x60] sm:$0xf]
        %v223 = vld [vmem:[%s178 + $0x64] sm:$0xff]
        %v224 = vld [vmem:[%s178 + $0x6c] sm:$0xff]
        %v225 = vld [vmem:[%s178 + $0x74] sm:$0xf]
        %v226 = vld [vmem:[%s178 + $0x78] sm:$0xff]
        %v227 = vld [vmem:[%s178 + $0x80] sm:$0xff]
        %v228 = vld [vmem:[%s178 + $0x88] sm:$0xf]
        %v229 = vld [vmem:[%s178 + $0x8c] sm:$0xff]
        %v230 = vld [vmem:[%s178 + $0x94] sm:$0xff]
        %v231 = vld [vmem:[%s178 + $0x9c] sm:$0xf]
        %v232 = vld [vmem:[%s178 + $0xa0] sm:$0xff]
        %v233 = vld [vmem:[%s178 + $0xa8] sm:$0xff]
        %v234 = vld [vmem:[%s178 + $0xb0] sm:$0xf]
        %v235 = vld [vmem:[%s178 + $0xb4] sm:$0xff]
        %v236 = vld [vmem:[%s178 + $0xbc] sm:$0xff]
        %v237 = vld [vmem:[%s178 + $0xc4] sm:$0xf]
        %v238 = vld [vmem:[%s178 + $0xc8] sm:$0xff]
        %v239 = vld [vmem:[%s178 + $0xd0] sm:$0xff]
        %v240 = vld [vmem:[%s178 + $0xd8] sm:$0xf]
        %v241 = vld [vmem:[%s178 + $0xdc] sm:$0xff]
        %v242 = vld [vmem:[%s178 + $0xe4] sm:$0xff]
        %v243 = vld [vmem:[%s178 + $0xec] sm:$0xf]
        %v244 = vld [vmem:[%s178 + $0xf0] sm:$0xff]
        %v245 = vld [vmem:[%s178 + $0xf8] sm:$0xff]
        %v246 = vld [vmem:[%s178 + $0x100] sm:$0xf]
        %v247 = vld [vmem:[%s178 + $0x104] sm:$0xff]
        %v248 = vld [vmem:[%s178 + $0x10c] sm:$0xff]
        %v249 = vld [vmem:[%s178 + $0x114] sm:$0xf]
        %v250 = vld [vmem:[%s178 + $0x118] sm:$0xff]
        %v251 = vld [vmem:[%s178 + $0x120] sm:$0xff]
        %v252 = vld [vmem:[%s178 + $0x128] sm:$0xf]
        %v253 = vld [vmem:[%s178 + $0x12c] sm:$0xff]
        %v254 = vld [vmem:[%s178 + $0x134] sm:$0xff]
        %v255 = vld [vmem:[%s178 + $0x13c] sm:$0xf]
        %v256 = vld [vmem:[%s178 + $0x140] sm:$0xff]
        %v257 = vld [vmem:[%s178 + $0x148] sm:$0xff]
        %v258 = vld [vmem:[%s178 + $0x150] sm:$0xf]
        %v259 = vld [vmem:[%s178 + $0x154] sm:$0xff]
        %v260 = vld [vmem:[%s178 + $0x15c] sm:$0xff]
        %v261 = vld [vmem:[%s178 + $0x164] sm:$0xf]
        %v262 = vld [vmem:[%s178 + $0x168] sm:$0xff]
        %v263 = vld [vmem:[%s178 + $0x170] sm:$0xff]
        %v264 = vld [vmem:[%s178 + $0x178] sm:$0xf]
        %v265 = vld [vmem:[%s178 + $0x17c] sm:$0xff]
        %v266 = vld [vmem:[%s178 + $0x184] sm:$0xff]
        %v267 = vld [vmem:[%s178 + $0x18c] sm:$0xf]
        %v268 = vld [vmem:[%s178 + $0x190] sm:$0xff]
        %v269 = vld [vmem:[%s178 + $0x198] sm:$0xff]
        %v270 = vld [vmem:[%s178 + $0x1a0] sm:$0xf]
        %v271 = vld [vmem:[%s178 + $0x1a4] sm:$0xff]
        %v272 = vld [vmem:[%s178 + $0x1ac] sm:$0xff]
        %v273 = vld [vmem:[%s178 + $0x1b4] sm:$0xf]
        %v274 = vld [vmem:[%s178 + $0x1b8] sm:$0xff]
        %v275 = vld [vmem:[%s178 + $0x1c0] sm:$0xff]
        %v276 = vld [vmem:[%s178 + $0x1c8] sm:$0xf]
        %v277 = vld [vmem:[%s178 + $0x1cc] sm:$0xff]
        %v278 = vld [vmem:[%s178 + $0x1d4] sm:$0xff]
        %v279 = vld [vmem:[%s178 + $0x1dc] sm:$0xf]
        %v280 = vld [vmem:[%s178 + $0x1e0] sm:$0xff]
        %v281 = vld [vmem:[%s178 + $0x1e8] sm:$0xff]
        %v282 = vld [vmem:[%s178 + $0x1f0] sm:$0xf]
        %v283 = vld [vmem:[%s178 + $0x1f4] sm:$0xff]
        %v284 = vld [vmem:[%s178 + $0x1fc] sm:$0xff]
        %v285 = vld [vmem:[%s178 + $0x204] sm:$0xf]
        %v286 = vld [vmem:[%s178 + $0x208] sm:$0xff]
        %v287 = vld [vmem:[%s178 + $0x210] sm:$0xff]
        %v288 = vld [vmem:[%s178 + $0x218] sm:$0xf]
        %v289 = vld [vmem:[%s178 + $0x21c] sm:$0xff]
        %v290 = vld [vmem:[%s178 + $0x224] sm:$0xff]
        %v291 = vld [vmem:[%s178 + $0x22c] sm:$0xf]
        %v292 = vld [vmem:[%s178 + $0x230] sm:$0xff]
        %v293 = vld [vmem:[%s178 + $0x238] sm:$0xff]
        %v294 = vld [vmem:[%s178 + $0x240] sm:$0xf]
        %v295 = vld [vmem:[%s178 + $0x244] sm:$0xff]
        %v296 = vld [vmem:[%s178 + $0x24c] sm:$0xff]
        %v297 = vld [vmem:[%s178 + $0x254] sm:$0xf]
        %v298 = vld [vmem:[%s178 + $0x258] sm:$0xff]
        %v299 = vld [vmem:[%s178 + $0x260] sm:$0xff]
        %v300 = vld [vmem:[%s178 + $0x268] sm:$0xf]
        %v301 = vld [vmem:[%s178 + $0x26c] sm:$0xff]
        %v302 = vld [vmem:[%s178 + $0x274] sm:$0xff]
        %v303 = vld [vmem:[%s178 + $0x27c] sm:$0xf]
        %v304 = vld [vmem:[#allocation5] sm:$0xff]
        %v305 = vld [vmem:[#allocation5 + $0x8] sm:$0xf]
        %v306 = vld [vmem:[#allocation5 + $0xc] sm:$0xff]
        %v307 = vld [vmem:[#allocation5 + $0x14] sm:$0xf]
        %v308 = vld [vmem:[#allocation5 + $0x18] sm:$0xff]
        %v309 = vld [vmem:[#allocation5 + $0x20] sm:$0xf]
        %v310 = vld [vmem:[#allocation5 + $0x24] sm:$0xff]
        %v311 = vld [vmem:[#allocation5 + $0x2c] sm:$0xf]
        %v312 = vld [vmem:[#allocation5 + $0x30] sm:$0xff]
        %v313 = vld [vmem:[#allocation5 + $0x38] sm:$0xf]
        %v314 = vld [vmem:[#allocation5 + $0x3c] sm:$0xff]
        %v315 = vld [vmem:[#allocation5 + $0x44] sm:$0xf]
        %v316 = vld [vmem:[#allocation5 + $0x48] sm:$0xff]
        %v317 = vld [vmem:[#allocation5 + $0x50] sm:$0xf]
        %v318 = vld [vmem:[#allocation5 + $0x54] sm:$0xff]
        %v319 = vld [vmem:[#allocation5 + $0x5c] sm:$0xf]
        %v320 = vld [vmem:[#allocation5 + $0x60] sm:$0xff]
        %v321 = vld [vmem:[#allocation5 + $0x68] sm:$0xf]
        %v322 = vld [vmem:[#allocation5 + $0x6c] sm:$0xff]
        %v323 = vld [vmem:[#allocation5 + $0x74] sm:$0xf]
        %v324 = vld [vmem:[#allocation5 + $0x78] sm:$0xff]
        %v325 = vld [vmem:[#allocation5 + $0x80] sm:$0xf]
        %v326 = vld [vmem:[#allocation5 + $0x84] sm:$0xff]
        %v327 = vld [vmem:[#allocation5 + $0x8c] sm:$0xf]
        %v328 = vld [vmem:[#allocation5 + $0x90] sm:$0xff]
        %v329 = vld [vmem:[#allocation5 + $0x98] sm:$0xf]
        %v330 = vld [vmem:[#allocation5 + $0x9c] sm:$0xff]
        %v331 = vld [vmem:[#allocation5 + $0xa4] sm:$0xf]
        %v332 = vld [vmem:[#allocation5 + $0xa8] sm:$0xff]
        %v333 = vld [vmem:[#allocation5 + $0xb0] sm:$0xf]
        %v334 = vld [vmem:[#allocation5 + $0xb4] sm:$0xff]
        %v335 = vld [vmem:[#allocation5 + $0xbc] sm:$0xf]
        %v336 = vld [vmem:[#allocation5 + $0xc0] sm:$0xff]
        %v337 = vld [vmem:[#allocation5 + $0xc8] sm:$0xf]
        %v338 = vld [vmem:[#allocation5 + $0xcc] sm:$0xff]
        %v339 = vld [vmem:[#allocation5 + $0xd4] sm:$0xf]
        %v340 = vld [vmem:[#allocation5 + $0xd8] sm:$0xff]
        %v341 = vld [vmem:[#allocation5 + $0xe0] sm:$0xf]
        %v342 = vld [vmem:[#allocation5 + $0xe4] sm:$0xff]
        %v343 = vld [vmem:[#allocation5 + $0xec] sm:$0xf]
        %v344 = vld [vmem:[#allocation5 + $0xf0] sm:$0xff]
        %v345 = vld [vmem:[#allocation5 + $0xf8] sm:$0xf]
        %v346 = vld [vmem:[#allocation5 + $0xfc] sm:$0xff]
        %v347 = vld [vmem:[#allocation5 + $0x104] sm:$0xf]
        %v348 = vld [vmem:[#allocation5 + $0x108] sm:$0xff]
        %v349 = vld [vmem:[#allocation5 + $0x110] sm:$0xf]
        %v350 = vld [vmem:[#allocation5 + $0x114] sm:$0xff]
        %v351 = vld [vmem:[#allocation5 + $0x11c] sm:$0xf]
        %v352 = vld [vmem:[#allocation5 + $0x120] sm:$0xff]
        %v353 = vld [vmem:[#allocation5 + $0x128] sm:$0xf]
        %v354 = vld [vmem:[#allocation5 + $0x12c] sm:$0xff]
        %v355 = vld [vmem:[#allocation5 + $0x134] sm:$0xf]
        %v356 = vld [vmem:[#allocation5 + $0x138] sm:$0xff]
        %v357 = vld [vmem:[#allocation5 + $0x140] sm:$0xf]
        %v358 = vld [vmem:[#allocation5 + $0x144] sm:$0xff]
        %v359 = vld [vmem:[#allocation5 + $0x14c] sm:$0xf]
        %v360 = vld [vmem:[#allocation5 + $0x150] sm:$0xff]
        %v361 = vld [vmem:[#allocation5 + $0x158] sm:$0xf]
        %v362 = vld [vmem:[#allocation5 + $0x15c] sm:$0xff]
        %v363 = vld [vmem:[#allocation5 + $0x164] sm:$0xf]
        %v364 = vld [vmem:[#allocation5 + $0x168] sm:$0xff]
        %v365 = vld [vmem:[#allocation5 + $0x170] sm:$0xf]
        %v366 = vld [vmem:[#allocation5 + $0x174] sm:$0xff]
        %v367 = vld [vmem:[#allocation5 + $0x17c] sm:$0xf]
        %v368 = vld [vmem:[#allocation5 + $0x180] sm:$0xff]
        %v369 = vld [vmem:[#allocation5 + $0x188] sm:$0xf]
        %v370 = vld [vmem:[#allocation5 + $0x18c] sm:$0xff]
        %v371 = vld [vmem:[#allocation5 + $0x194] sm:$0xf]
        %v372 = vld [vmem:[#allocation5 + $0x198] sm:$0xff]
        %v373 = vld [vmem:[#allocation5 + $0x1a0] sm:$0xf]
        %v374 = vld [vmem:[#allocation5 + $0x1a4] sm:$0xff]
        %v375 = vld [vmem:[#allocation5 + $0x1ac] sm:$0xf]
        %v376 = vld [vmem:[#allocation5 + $0x1b0] sm:$0xff]
        %v377 = vld [vmem:[#allocation5 + $0x1b8] sm:$0xf]
        %v378 = vld [vmem:[#allocation5 + $0x1bc] sm:$0xff]
        %v379 = vld [vmem:[#allocation5 + $0x1c4] sm:$0xf]
        %v380 = vld [vmem:[#allocation5 + $0x1c8] sm:$0xff]
        %v381 = vld [vmem:[#allocation5 + $0x1d0] sm:$0xf]
        %v382 = vld [vmem:[#allocation5 + $0x1d4] sm:$0xff]
        %v383 = vld [vmem:[#allocation5 + $0x1dc] sm:$0xf]
        %v384 = vld [vmem:[#allocation5 + $0x1e0] sm:$0xff]
        %v385 = vld [vmem:[#allocation5 + $0x1e8] sm:$0xf]
        %v386 = vld [vmem:[#allocation5 + $0x1ec] sm:$0xff]
        %v387 = vld [vmem:[#allocation5 + $0x1f4] sm:$0xf]
        %v388 = vld [vmem:[#allocation5 + $0x1f8] sm:$0xff]
        %v389 = vld [vmem:[#allocation5 + $0x200] sm:$0xf]
        %v390 = vld [vmem:[#allocation5 + $0x204] sm:$0xff]
        %v391 = vld [vmem:[#allocation5 + $0x20c] sm:$0xf]
        %v392 = vld [vmem:[#allocation5 + $0x210] sm:$0xff]
        %v393 = vld [vmem:[#allocation5 + $0x218] sm:$0xf]
        %v394 = vld [vmem:[#allocation5 + $0x21c] sm:$0xff]
        %v395 = vld [vmem:[#allocation5 + $0x224] sm:$0xf]
        %v396 = vld [vmem:[#allocation5 + $0x228] sm:$0xff]
        %v397 = vld [vmem:[#allocation5 + $0x230] sm:$0xf]
        %v398 = vld [vmem:[#allocation5 + $0x234] sm:$0xff]
        %v399 = vld [vmem:[#allocation5 + $0x23c] sm:$0xf]
        %v400 = vld [vmem:[#allocation5 + $0x240] sm:$0xff]
        %v401 = vld [vmem:[#allocation5 + $0x248] sm:$0xf]
        %v402 = vld [vmem:[#allocation5 + $0x24c] sm:$0xff]
        %v403 = vld [vmem:[#allocation5 + $0x254] sm:$0xf]
        %v404 = vld [vmem:[#allocation5 + $0x258] sm:$0xff]
        %v405 = vld [vmem:[#allocation5 + $0x260] sm:$0xf]
        %v406 = vld [vmem:[#allocation5 + $0x264] sm:$0xff]
        %v407 = vld [vmem:[#allocation5 + $0x26c] sm:$0xf]
        %v408 = vld [vmem:[#allocation5 + $0x270] sm:$0xff]
        %v409 = vld [vmem:[#allocation5 + $0x278] sm:$0xf]
        %v410 = vld [vmem:[#allocation5 + $0x27c] sm:$0xff]
        %v411 = vld [vmem:[#allocation5 + $0x284] sm:$0xf]
        %v412 = vld [vmem:[#allocation5 + $0x288] sm:$0xff]
        %v413 = vld [vmem:[#allocation5 + $0x290] sm:$0xf]
        %v414 = vld [vmem:[#allocation5 + $0x294] sm:$0xff]
        %v415 = vld [vmem:[#allocation5 + $0x29c] sm:$0xf]
        %v416 = vld [vmem:[#allocation5 + $0x2a0] sm:$0xff]
        %v417 = vld [vmem:[#allocation5 + $0x2a8] sm:$0xf]
        %v418 = vld [vmem:[#allocation5 + $0x2ac] sm:$0xff]
        %v419 = vld [vmem:[#allocation5 + $0x2b4] sm:$0xf]
        %v420 = vld [vmem:[#allocation5 + $0x2b8] sm:$0xff]
        %v421 = vld [vmem:[#allocation5 + $0x2c0] sm:$0xf]
        %v422 = vld [vmem:[#allocation5 + $0x2c4] sm:$0xff]
        %v423 = vld [vmem:[#allocation5 + $0x2cc] sm:$0xf]
        %v424 = vld [vmem:[#allocation5 + $0x2d0] sm:$0xff]
        %v425 = vld [vmem:[#allocation5 + $0x2d8] sm:$0xf]
        %v426 = vld [vmem:[#allocation5 + $0x2dc] sm:$0xff]
        %v427 = vld [vmem:[#allocation5 + $0x2e4] sm:$0xf]
        %v428 = vld [vmem:[#allocation5 + $0x2e8] sm:$0xff]
        %v429 = vld [vmem:[#allocation5 + $0x2f0] sm:$0xf]
        %v430 = vld [vmem:[#allocation5 + $0x2f4] sm:$0xff]
        %v431 = vld [vmem:[#allocation5 + $0x2fc] sm:$0xf]
        %v432 = vld [vmem:[#allocation5 + $0x300] sm:$0xff]
        %v433 = vld [vmem:[#allocation5 + $0x308] sm:$0xf]
        %v434 = vld [vmem:[#allocation5 + $0x30c] sm:$0xff]
        %v435 = vld [vmem:[#allocation5 + $0x314] sm:$0xf]
        %v436 = vld [vmem:[#allocation5 + $0x318] sm:$0xff]
        %v437 = vld [vmem:[#allocation5 + $0x320] sm:$0xf]
        %v438 = vld [vmem:[#allocation5 + $0x324] sm:$0xff]
        %v439 = vld [vmem:[#allocation5 + $0x32c] sm:$0xf]
        %v440 = vld [vmem:[#allocation5 + $0x330] sm:$0xff]
        %v441 = vld [vmem:[#allocation5 + $0x338] sm:$0xf]
        %v442 = vld [vmem:[#allocation5 + $0x33c] sm:$0xff]
        %v443 = vld [vmem:[#allocation5 + $0x344] sm:$0xf]
        %v444 = vld [vmem:[#allocation5 + $0x348] sm:$0xff]
        %v445 = vld [vmem:[#allocation5 + $0x350] sm:$0xf]
        %v446 = vld [vmem:[#allocation5 + $0x354] sm:$0xff]
        %v447 = vld [vmem:[#allocation5 + $0x35c] sm:$0xf]
        %v448 = vld [vmem:[#allocation5 + $0x360] sm:$0xff]
        %v449 = vld [vmem:[#allocation5 + $0x368] sm:$0xf]
        %v450 = vld [vmem:[#allocation5 + $0x36c] sm:$0xff]
        %v451 = vld [vmem:[#allocation5 + $0x374] sm:$0xf]
        %v452 = vld [vmem:[#allocation5 + $0x378] sm:$0xff]
        %v453 = vld [vmem:[#allocation5 + $0x380] sm:$0xf]
        %v454 = vld [vmem:[#allocation5 + $0x384] sm:$0xff]
        %v455 = vld [vmem:[#allocation5 + $0x38c] sm:$0xf]
        %v456 = vld [vmem:[#allocation5 + $0x390] sm:$0xff]
        %v457 = vld [vmem:[#allocation5 + $0x398] sm:$0xf]
        %v458 = vld [vmem:[#allocation5 + $0x39c] sm:$0xff]
        %v459 = vld [vmem:[#allocation5 + $0x3a4] sm:$0xf]
        %v460 = vld [vmem:[#allocation5 + $0x3a8] sm:$0xff]
        %v461 = vld [vmem:[#allocation5 + $0x3b0] sm:$0xf]
        %v462 = vld [vmem:[#allocation5 + $0x3b4] sm:$0xff]
        %v463 = vld [vmem:[#allocation5 + $0x3bc] sm:$0xf]
        %v464 = vld [vmem:[%s2] sm:$0x7]
        %v466 = vlaneseq
        %v467 = vshrl.u32 %v466, 7
        %v468 = vsub.s32 0, %v467
        %v469 = vrot.slane %v464, %v468
        %v470 = vlaneseq
        %v471 = vshrl.u32 %v470, 7
        %v472 = vsub.s32 1, %v471
        %v473 = vrot.slane %v464, %v472
        %v474 = vlaneseq
        %v475 = vshrl.u32 %v474, 7
        %v476 = vsub.s32 2, %v475
        %v477 = vrot.slane %v464, %v476
        %v577 = vunpack.c.l.b16 %v208
        %v578 = vunpack.c.h.b16 %v208
        %v579 = vunpack.c.l.b16 %v209
        %v580 = vunpack.c.h.b16 %v209
        %v581 = vunpack.c.l.b16 %v210
        %v582 = vunpack.c.l.b16 %v211
        %v583 = vunpack.c.h.b16 %v211
        %v584 = vunpack.c.l.b16 %v212
        %v585 = vunpack.c.h.b16 %v212
        %v586 = vunpack.c.l.b16 %v213
        %v587 = vunpack.c.l.b16 %v214
        %v588 = vunpack.c.h.b16 %v214
        %v589 = vunpack.c.l.b16 %v215
        %v590 = vunpack.c.h.b16 %v215
        %v591 = vunpack.c.l.b16 %v216
        %v592 = vunpack.c.l.b16 %v217
        %v593 = vunpack.c.h.b16 %v217
        %v594 = vunpack.c.l.b16 %v218
        %v595 = vunpack.c.h.b16 %v218
        %v596 = vunpack.c.l.b16 %v219
        %v597 = vunpack.c.l.b16 %v220
        %v598 = vunpack.c.h.b16 %v220
        %v599 = vunpack.c.l.b16 %v221
        %v600 = vunpack.c.h.b16 %v221
        %v601 = vunpack.c.l.b16 %v222
        %v602 = vunpack.c.l.b16 %v223
        %v603 = vunpack.c.h.b16 %v223
        %v604 = vunpack.c.l.b16 %v224
        %v605 = vunpack.c.h.b16 %v224
        %v606 = vunpack.c.l.b16 %v225
        %v607 = vunpack.c.l.b16 %v226
        %v608 = vunpack.c.h.b16 %v226
        %v609 = vunpack.c.l.b16 %v227
        %v610 = vunpack.c.h.b16 %v227
        %v611 = vunpack.c.l.b16 %v228
        %v612 = vunpack.c.l.b16 %v229
        %v613 = vunpack.c.h.b16 %v229
        %v614 = vunpack.c.l.b16 %v230
        %v615 = vunpack.c.h.b16 %v230
        %v616 = vunpack.c.l.b16 %v231
        %v617 = vunpack.c.l.b16 %v232
        %v618 = vunpack.c.h.b16 %v232
        %v619 = vunpack.c.l.b16 %v233
        %v620 = vunpack.c.h.b16 %v233
        %v621 = vunpack.c.l.b16 %v234
        %v622 = vunpack.c.l.b16 %v235
        %v623 = vunpack.c.h.b16 %v235
        %v624 = vunpack.c.l.b16 %v236
        %v625 = vunpack.c.h.b16 %v236
        %v626 = vunpack.c.l.b16 %v237
        %v627 = vunpack.c.l.b16 %v238
        %v628 = vunpack.c.h.b16 %v238
        %v629 = vunpack.c.l.b16 %v239
        %v630 = vunpack.c.h.b16 %v239
        %v631 = vunpack.c.l.b16 %v240
        %v632 = vunpack.c.l.b16 %v241
        %v633 = vunpack.c.h.b16 %v241
        %v634 = vunpack.c.l.b16 %v242
        %v635 = vunpack.c.h.b16 %v242
        %v636 = vunpack.c.l.b16 %v243
        %v637 = vunpack.c.l.b16 %v244
        %v638 = vunpack.c.h.b16 %v244
        %v639 = vunpack.c.l.b16 %v245
        %v640 = vunpack.c.h.b16 %v245
        %v641 = vunpack.c.l.b16 %v246
        %v642 = vunpack.c.l.b16 %v247
        %v643 = vunpack.c.h.b16 %v247
        %v644 = vunpack.c.l.b16 %v248
        %v645 = vunpack.c.h.b16 %v248
        %v646 = vunpack.c.l.b16 %v249
        %v647 = vunpack.c.l.b16 %v250
        %v648 = vunpack.c.h.b16 %v250
        %v649 = vunpack.c.l.b16 %v251
        %v650 = vunpack.c.h.b16 %v251
        %v651 = vunpack.c.l.b16 %v252
        %v652 = vunpack.c.l.b16 %v253
        %v653 = vunpack.c.h.b16 %v253
        %v654 = vunpack.c.l.b16 %v254
        %v655 = vunpack.c.h.b16 %v254
        %v656 = vunpack.c.l.b16 %v255
        %v657 = vunpack.c.l.b16 %v256
        %v658 = vunpack.c.h.b16 %v256
        %v659 = vunpack.c.l.b16 %v257
        %v660 = vunpack.c.h.b16 %v257
        %v661 = vunpack.c.l.b16 %v258
        %v662 = vunpack.c.l.b16 %v259
        %v663 = vunpack.c.h.b16 %v259
        %v664 = vunpack.c.l.b16 %v260
        %v665 = vunpack.c.h.b16 %v260
        %v666 = vunpack.c.l.b16 %v261
        %v667 = vunpack.c.l.b16 %v262
        %v668 = vunpack.c.h.b16 %v262
        %v669 = vunpack.c.l.b16 %v263
        %v670 = vunpack.c.h.b16 %v263
        %v671 = vunpack.c.l.b16 %v264
        %v672 = vunpack.c.l.b16 %v265
        %v673 = vunpack.c.h.b16 %v265
        %v674 = vunpack.c.l.b16 %v266
        %v675 = vunpack.c.h.b16 %v266
        %v676 = vunpack.c.l.b16 %v267
        %v677 = vunpack.c.l.b16 %v268
        %v678 = vunpack.c.h.b16 %v268
        %v679 = vunpack.c.l.b16 %v269
        %v680 = vunpack.c.h.b16 %v269
        %v681 = vunpack.c.l.b16 %v270
        %v682 = vunpack.c.l.b16 %v271
        %v683 = vunpack.c.h.b16 %v271
        %v684 = vunpack.c.l.b16 %v272
        %v685 = vunpack.c.h.b16 %v272
        %v686 = vunpack.c.l.b16 %v273
        %v687 = vunpack.c.l.b16 %v274
        %v688 = vunpack.c.h.b16 %v274
        %v689 = vunpack.c.l.b16 %v275
        %v690 = vunpack.c.h.b16 %v275
        %v691 = vunpack.c.l.b16 %v276
        %v692 = vunpack.c.l.b16 %v277
        %v693 = vunpack.c.h.b16 %v277
        %v694 = vunpack.c.l.b16 %v278
        %v695 = vunpack.c.h.b16 %v278
        %v696 = vunpack.c.l.b16 %v279
        %v697 = vunpack.c.l.b16 %v280
        %v698 = vunpack.c.h.b16 %v280
        %v699 = vunpack.c.l.b16 %v281
        %v700 = vunpack.c.h.b16 %v281
        %v701 = vunpack.c.l.b16 %v282
        %v702 = vunpack.c.l.b16 %v283
        %v703 = vunpack.c.h.b16 %v283
        %v704 = vunpack.c.l.b16 %v284
        %v705 = vunpack.c.h.b16 %v284
        %v706 = vunpack.c.l.b16 %v285
        %v707 = vunpack.c.l.b16 %v286
        %v708 = vunpack.c.h.b16 %v286
        %v709 = vunpack.c.l.b16 %v287
        %v710 = vunpack.c.h.b16 %v287
        %v711 = vunpack.c.l.b16 %v288
        %v712 = vunpack.c.l.b16 %v289
        %v713 = vunpack.c.h.b16 %v289
        %v714 = vunpack.c.l.b16 %v290
        %v715 = vunpack.c.h.b16 %v290
        %v716 = vunpack.c.l.b16 %v291
        %v717 = vunpack.c.l.b16 %v292
        %v718 = vunpack.c.h.b16 %v292
        %v719 = vunpack.c.l.b16 %v293
        %v720 = vunpack.c.h.b16 %v293
        %v721 = vunpack.c.l.b16 %v294
        %v722 = vunpack.c.l.b16 %v295
        %v723 = vunpack.c.h.b16 %v295
        %v724 = vunpack.c.l.b16 %v296
        %v725 = vunpack.c.h.b16 %v296
        %v726 = vunpack.c.l.b16 %v297
        %v727 = vunpack.c.l.b16 %v298
        %v728 = vunpack.c.h.b16 %v298
        %v729 = vunpack.c.l.b16 %v299
        %v730 = vunpack.c.h.b16 %v299
        %v731 = vunpack.c.l.b16 %v300
        %v732 = vunpack.c.l.b16 %v301
        %v733 = vunpack.c.h.b16 %v301
        %v734 = vunpack.c.l.b16 %v302
        %v735 = vunpack.c.h.b16 %v302
        %v736 = vunpack.c.l.b16 %v303
        %v737 = vpack.c.b16 %v582, %v577
        %v738 = vpack.c.b16 %v583, %v578
        %v739 = vpack.c.b16 %v584, %v579
        %v740 = vpack.c.b16 %v585, %v580
        %v741 = vpack.c.b16 %v586, %v581
        %v742 = vpack.c.b16 %v592, %v587
        %v743 = vpack.c.b16 %v593, %v588
        %v744 = vpack.c.b16 %v594, %v589
        %v745 = vpack.c.b16 %v595, %v590
        %v746 = vpack.c.b16 %v596, %v591
        %v747 = vpack.c.b16 %v602, %v597
        %v748 = vpack.c.b16 %v603, %v598
        %v749 = vpack.c.b16 %v604, %v599
        %v750 = vpack.c.b16 %v605, %v600
        %v751 = vpack.c.b16 %v606, %v601
        %v752 = vpack.c.b16 %v612, %v607
        %v753 = vpack.c.b16 %v613, %v608
        %v754 = vpack.c.b16 %v614, %v609
        %v755 = vpack.c.b16 %v615, %v610
        %v756 = vpack.c.b16 %v616, %v611
        %v757 = vpack.c.b16 %v622, %v617
        %v758 = vpack.c.b16 %v623, %v618
        %v759 = vpack.c.b16 %v624, %v619
        %v760 = vpack.c.b16 %v625, %v620
        %v761 = vpack.c.b16 %v626, %v621
        %v762 = vpack.c.b16 %v632, %v627
        %v763 = vpack.c.b16 %v633, %v628
        %v764 = vpack.c.b16 %v634, %v629
        %v765 = vpack.c.b16 %v635, %v630
        %v766 = vpack.c.b16 %v636, %v631
        %v767 = vpack.c.b16 %v642, %v637
        %v768 = vpack.c.b16 %v643, %v638
        %v769 = vpack.c.b16 %v644, %v639
        %v770 = vpack.c.b16 %v645, %v640
        %v771 = vpack.c.b16 %v646, %v641
        %v772 = vpack.c.b16 %v652, %v647
        %v773 = vpack.c.b16 %v653, %v648
        %v774 = vpack.c.b16 %v654, %v649
        %v775 = vpack.c.b16 %v655, %v650
        %v776 = vpack.c.b16 %v656, %v651
        %v777 = vpack.c.b16 %v662, %v657
        %v778 = vpack.c.b16 %v663, %v658
        %v779 = vpack.c.b16 %v664, %v659
        %v780 = vpack.c.b16 %v665, %v660
        %v781 = vpack.c.b16 %v666, %v661
        %v782 = vpack.c.b16 %v672, %v667
        %v783 = vpack.c.b16 %v673, %v668
        %v784 = vpack.c.b16 %v674, %v669
        %v785 = vpack.c.b16 %v675, %v670
        %v786 = vpack.c.b16 %v676, %v671
        %v787 = vpack.c.b16 %v682, %v677
        %v788 = vpack.c.b16 %v683, %v678
        %v789 = vpack.c.b16 %v684, %v679
        %v790 = vpack.c.b16 %v685, %v680
        %v791 = vpack.c.b16 %v686, %v681
        %v792 = vpack.c.b16 %v692, %v687
        %v793 = vpack.c.b16 %v693, %v688
        %v794 = vpack.c.b16 %v694, %v689
        %v795 = vpack.c.b16 %v695, %v690
        %v796 = vpack.c.b16 %v696, %v691
        %v797 = vpack.c.b16 %v702, %v697
        %v798 = vpack.c.b16 %v703, %v698
        %v799 = vpack.c.b16 %v704, %v699
        %v800 = vpack.c.b16 %v705, %v700
        %v801 = vpack.c.b16 %v706, %v701
        %v802 = vpack.c.b16 %v712, %v707
        %v803 = vpack.c.b16 %v713, %v708
        %v804 = vpack.c.b16 %v714, %v709
        %v805 = vpack.c.b16 %v715, %v710
        %v806 = vpack.c.b16 %v716, %v711
        %v807 = vpack.c.b16 %v722, %v717
        %v808 = vpack.c.b16 %v723, %v718
        %v809 = vpack.c.b16 %v724, %v719
        %v810 = vpack.c.b16 %v725, %v720
        %v811 = vpack.c.b16 %v726, %v721
        %v812 = vpack.c.b16 %v732, %v727
        %v813 = vpack.c.b16 %v733, %v728
        %v814 = vpack.c.b16 %v734, %v729
        %v815 = vpack.c.b16 %v735, %v730
        %v816 = vpack.c.b16 %v736, %v731
        %v1057 = vunpack.c.l.b16 %v304
        %v1058 = vunpack.c.h.b16 %v304
        %v1059 = vunpack.c.l.b16 %v305
        %v1060 = vunpack.c.l.b16 %v306
        %v1061 = vunpack.c.h.b16 %v306
        %v1062 = vunpack.c.l.b16 %v307
        %v1063 = vunpack.c.l.b16 %v308
        %v1064 = vunpack.c.h.b16 %v308
        %v1065 = vunpack.c.l.b16 %v309
        %v1066 = vunpack.c.l.b16 %v310
        %v1067 = vunpack.c.h.b16 %v310
        %v1068 = vunpack.c.l.b16 %v311
        %v1069 = vunpack.c.l.b16 %v312
        %v1070 = vunpack.c.h.b16 %v312
        %v1071 = vunpack.c.l.b16 %v313
        %v1072 = vunpack.c.l.b16 %v314
        %v1073 = vunpack.c.h.b16 %v314
        %v1074 = vunpack.c.l.b16 %v315
        %v1075 = vunpack.c.l.b16 %v316
        %v1076 = vunpack.c.h.b16 %v316
        %v1077 = vunpack.c.l.b16 %v317
        %v1078 = vunpack.c.l.b16 %v318
        %v1079 = vunpack.c.h.b16 %v318
        %v1080 = vunpack.c.l.b16 %v319
        %v1081 = vunpack.c.l.b16 %v320
        %v1082 = vunpack.c.h.b16 %v320
        %v1083 = vunpack.c.l.b16 %v321
        %v1084 = vunpack.c.l.b16 %v322
        %v1085 = vunpack.c.h.b16 %v322
        %v1086 = vunpack.c.l.b16 %v323
        %v1087 = vunpack.c.l.b16 %v324
        %v1088 = vunpack.c.h.b16 %v324
        %v1089 = vunpack.c.l.b16 %v325
        %v1090 = vunpack.c.l.b16 %v326
        %v1091 = vunpack.c.h.b16 %v326
        %v1092 = vunpack.c.l.b16 %v327
        %v1093 = vunpack.c.l.b16 %v328
        %v1094 = vunpack.c.h.b16 %v328
        %v1095 = vunpack.c.l.b16 %v329
        %v1096 = vunpack.c.l.b16 %v330
        %v1097 = vunpack.c.h.b16 %v330
        %v1098 = vunpack.c.l.b16 %v331
        %v1099 = vunpack.c.l.b16 %v332
        %v1100 = vunpack.c.h.b16 %v332
        %v1101 = vunpack.c.l.b16 %v333
        %v1102 = vunpack.c.l.b16 %v334
        %v1103 = vunpack.c.h.b16 %v334
        %v1104 = vunpack.c.l.b16 %v335
        %v1105 = vunpack.c.l.b16 %v336
        %v1106 = vunpack.c.h.b16 %v336
        %v1107 = vunpack.c.l.b16 %v337
        %v1108 = vunpack.c.l.b16 %v338
        %v1109 = vunpack.c.h.b16 %v338
        %v1110 = vunpack.c.l.b16 %v339
        %v1111 = vunpack.c.l.b16 %v340
        %v1112 = vunpack.c.h.b16 %v340
        %v1113 = vunpack.c.l.b16 %v341
        %v1114 = vunpack.c.l.b16 %v342
        %v1115 = vunpack.c.h.b16 %v342
        %v1116 = vunpack.c.l.b16 %v343
        %v1117 = vunpack.c.l.b16 %v344
        %v1118 = vunpack.c.h.b16 %v344
        %v1119 = vunpack.c.l.b16 %v345
        %v1120 = vunpack.c.l.b16 %v346
        %v1121 = vunpack.c.h.b16 %v346
        %v1122 = vunpack.c.l.b16 %v347
        %v1123 = vunpack.c.l.b16 %v348
        %v1124 = vunpack.c.h.b16 %v348
        %v1125 = vunpack.c.l.b16 %v349
        %v1126 = vunpack.c.l.b16 %v350
        %v1127 = vunpack.c.h.b16 %v350
        %v1128 = vunpack.c.l.b16 %v351
        %v1129 = vunpack.c.l.b16 %v352
        %v1130 = vunpack.c.h.b16 %v352
        %v1131 = vunpack.c.l.b16 %v353
        %v1132 = vunpack.c.l.b16 %v354
        %v1133 = vunpack.c.h.b16 %v354
        %v1134 = vunpack.c.l.b16 %v355
        %v1135 = vunpack.c.l.b16 %v356
        %v1136 = vunpack.c.h.b16 %v356
        %v1137 = vunpack.c.l.b16 %v357
        %v1138 = vunpack.c.l.b16 %v358
        %v1139 = vunpack.c.h.b16 %v358
        %v1140 = vunpack.c.l.b16 %v359
        %v1141 = vunpack.c.l.b16 %v360
        %v1142 = vunpack.c.h.b16 %v360
        %v1143 = vunpack.c.l.b16 %v361
        %v1144 = vunpack.c.l.b16 %v362
        %v1145 = vunpack.c.h.b16 %v362
        %v1146 = vunpack.c.l.b16 %v363
        %v1147 = vunpack.c.l.b16 %v364
        %v1148 = vunpack.c.h.b16 %v364
        %v1149 = vunpack.c.l.b16 %v365
        %v1150 = vunpack.c.l.b16 %v366
        %v1151 = vunpack.c.h.b16 %v366
        %v1152 = vunpack.c.l.b16 %v367
        %v1153 = vunpack.c.l.b16 %v368
        %v1154 = vunpack.c.h.b16 %v368
        %v1155 = vunpack.c.l.b16 %v369
        %v1156 = vunpack.c.l.b16 %v370
        %v1157 = vunpack.c.h.b16 %v370
        %v1158 = vunpack.c.l.b16 %v371
        %v1159 = vunpack.c.l.b16 %v372
        %v1160 = vunpack.c.h.b16 %v372
        %v1161 = vunpack.c.l.b16 %v373
        %v1162 = vunpack.c.l.b16 %v374
        %v1163 = vunpack.c.h.b16 %v374
        %v1164 = vunpack.c.l.b16 %v375
        %v1165 = vunpack.c.l.b16 %v376
        %v1166 = vunpack.c.h.b16 %v376
        %v1167 = vunpack.c.l.b16 %v377
        %v1168 = vunpack.c.l.b16 %v378
        %v1169 = vunpack.c.h.b16 %v378
        %v1170 = vunpack.c.l.b16 %v379
        %v1171 = vunpack.c.l.b16 %v380
        %v1172 = vunpack.c.h.b16 %v380
        %v1173 = vunpack.c.l.b16 %v381
        %v1174 = vunpack.c.l.b16 %v382
        %v1175 = vunpack.c.h.b16 %v382
        %v1176 = vunpack.c.l.b16 %v383
        %v1177 = vunpack.c.l.b16 %v384
        %v1178 = vunpack.c.h.b16 %v384
        %v1179 = vunpack.c.l.b16 %v385
        %v1180 = vunpack.c.l.b16 %v386
        %v1181 = vunpack.c.h.b16 %v386
        %v1182 = vunpack.c.l.b16 %v387
        %v1183 = vunpack.c.l.b16 %v388
        %v1184 = vunpack.c.h.b16 %v388
        %v1185 = vunpack.c.l.b16 %v389
        %v1186 = vunpack.c.l.b16 %v390
        %v1187 = vunpack.c.h.b16 %v390
        %v1188 = vunpack.c.l.b16 %v391
        %v1189 = vunpack.c.l.b16 %v392
        %v1190 = vunpack.c.h.b16 %v392
        %v1191 = vunpack.c.l.b16 %v393
        %v1192 = vunpack.c.l.b16 %v394
        %v1193 = vunpack.c.h.b16 %v394
        %v1194 = vunpack.c.l.b16 %v395
        %v1195 = vunpack.c.l.b16 %v396
        %v1196 = vunpack.c.h.b16 %v396
        %v1197 = vunpack.c.l.b16 %v397
        %v1198 = vunpack.c.l.b16 %v398
        %v1199 = vunpack.c.h.b16 %v398
        %v1200 = vunpack.c.l.b16 %v399
        %v1201 = vunpack.c.l.b16 %v400
        %v1202 = vunpack.c.h.b16 %v400
        %v1203 = vunpack.c.l.b16 %v401
        %v1204 = vunpack.c.l.b16 %v402
        %v1205 = vunpack.c.h.b16 %v402
        %v1206 = vunpack.c.l.b16 %v403
        %v1207 = vunpack.c.l.b16 %v404
        %v1208 = vunpack.c.h.b16 %v404
        %v1209 = vunpack.c.l.b16 %v405
        %v1210 = vunpack.c.l.b16 %v406
        %v1211 = vunpack.c.h.b16 %v406
        %v1212 = vunpack.c.l.b16 %v407
        %v1213 = vunpack.c.l.b16 %v408
        %v1214 = vunpack.c.h.b16 %v408
        %v1215 = vunpack.c.l.b16 %v409
        %v1216 = vunpack.c.l.b16 %v410
        %v1217 = vunpack.c.h.b16 %v410
        %v1218 = vunpack.c.l.b16 %v411
        %v1219 = vunpack.c.l.b16 %v412
        %v1220 = vunpack.c.h.b16 %v412
        %v1221 = vunpack.c.l.b16 %v413
        %v1222 = vunpack.c.l.b16 %v414
        %v1223 = vunpack.c.h.b16 %v414
        %v1224 = vunpack.c.l.b16 %v415
        %v1225 = vunpack.c.l.b16 %v416
        %v1226 = vunpack.c.h.b16 %v416
        %v1227 = vunpack.c.l.b16 %v417
        %v1228 = vunpack.c.l.b16 %v418
        %v1229 = vunpack.c.h.b16 %v418
        %v1230 = vunpack.c.l.b16 %v419
        %v1231 = vunpack.c.l.b16 %v420
        %v1232 = vunpack.c.h.b16 %v420
        %v1233 = vunpack.c.l.b16 %v421
        %v1234 = vunpack.c.l.b16 %v422
        %v1235 = vunpack.c.h.b16 %v422
        %v1236 = vunpack.c.l.b16 %v423
        %v1237 = vunpack.c.l.b16 %v424
        %v1238 = vunpack.c.h.b16 %v424
        %v1239 = vunpack.c.l.b16 %v425
        %v1240 = vunpack.c.l.b16 %v426
        %v1241 = vunpack.c.h.b16 %v426
        %v1242 = vunpack.c.l.b16 %v427
        %v1243 = vunpack.c.l.b16 %v428
        %v1244 = vunpack.c.h.b16 %v428
        %v1245 = vunpack.c.l.b16 %v429
        %v1246 = vunpack.c.l.b16 %v430
        %v1247 = vunpack.c.h.b16 %v430
        %v1248 = vunpack.c.l.b16 %v431
        %v1249 = vunpack.c.l.b16 %v432
        %v1250 = vunpack.c.h.b16 %v432
        %v1251 = vunpack.c.l.b16 %v433
        %v1252 = vunpack.c.l.b16 %v434
        %v1253 = vunpack.c.h.b16 %v434
        %v1254 = vunpack.c.l.b16 %v435
        %v1255 = vunpack.c.l.b16 %v436
        %v1256 = vunpack.c.h.b16 %v436
        %v1257 = vunpack.c.l.b16 %v437
        %v1258 = vunpack.c.l.b16 %v438
        %v1259 = vunpack.c.h.b16 %v438
        %v1260 = vunpack.c.l.b16 %v439
        %v1261 = vunpack.c.l.b16 %v440
        %v1262 = vunpack.c.h.b16 %v440
        %v1263 = vunpack.c.l.b16 %v441
        %v1264 = vunpack.c.l.b16 %v442
        %v1265 = vunpack.c.h.b16 %v442
        %v1266 = vunpack.c.l.b16 %v443
        %v1267 = vunpack.c.l.b16 %v444
        %v1268 = vunpack.c.h.b16 %v444
        %v1269 = vunpack.c.l.b16 %v445
        %v1270 = vunpack.c.l.b16 %v446
        %v1271 = vunpack.c.h.b16 %v446
        %v1272 = vunpack.c.l.b16 %v447
        %v1273 = vunpack.c.l.b16 %v448
        %v1274 = vunpack.c.h.b16 %v448
        %v1275 = vunpack.c.l.b16 %v449
        %v1276 = vunpack.c.l.b16 %v450
        %v1277 = vunpack.c.h.b16 %v450
        %v1278 = vunpack.c.l.b16 %v451
        %v1279 = vunpack.c.l.b16 %v452
        %v1280 = vunpack.c.h.b16 %v452
        %v1281 = vunpack.c.l.b16 %v453
        %v1282 = vunpack.c.l.b16 %v454
        %v1283 = vunpack.c.h.b16 %v454
        %v1284 = vunpack.c.l.b16 %v455
        %v1285 = vunpack.c.l.b16 %v456
        %v1286 = vunpack.c.h.b16 %v456
        %v1287 = vunpack.c.l.b16 %v457
        %v1288 = vunpack.c.l.b16 %v458
        %v1289 = vunpack.c.h.b16 %v458
        %v1290 = vunpack.c.l.b16 %v459
        %v1291 = vunpack.c.l.b16 %v460
        %v1292 = vunpack.c.h.b16 %v460
        %v1293 = vunpack.c.l.b16 %v461
        %v1294 = vunpack.c.l.b16 %v462
        %v1295 = vunpack.c.h.b16 %v462
        %v1296 = vunpack.c.l.b16 %v463
        %v1297 = vpack.c.b16 %v1060, %v1057
        %v1298 = vpack.c.b16 %v1061, %v1058
        %v1299 = vpack.c.b16 %v1062, %v1059
        %v1300 = vpack.c.b16 %v1066, %v1063
        %v1301 = vpack.c.b16 %v1067, %v1064
        %v1302 = vpack.c.b16 %v1068, %v1065
        %v1303 = vpack.c.b16 %v1072, %v1069
        %v1304 = vpack.c.b16 %v1073, %v1070
        %v1305 = vpack.c.b16 %v1074, %v1071
        %v1306 = vpack.c.b16 %v1078, %v1075
        %v1307 = vpack.c.b16 %v1079, %v1076
        %v1308 = vpack.c.b16 %v1080, %v1077
        %v1309 = vpack.c.b16 %v1084, %v1081
        %v1310 = vpack.c.b16 %v1085, %v1082
        %v1311 = vpack.c.b16 %v1086, %v1083
        %v1312 = vpack.c.b16 %v1090, %v1087
        %v1313 = vpack.c.b16 %v1091, %v1088
        %v1314 = vpack.c.b16 %v1092, %v1089
        %v1315 = vpack.c.b16 %v1096, %v1093
        %v1316 = vpack.c.b16 %v1097, %v1094
        %v1317 = vpack.c.b16 %v1098, %v1095
        %v1318 = vpack.c.b16 %v1102, %v1099
        %v1319 = vpack.c.b16 %v1103, %v1100
        %v1320 = vpack.c.b16 %v1104, %v1101
        %v1321 = vpack.c.b16 %v1108, %v1105
        %v1322 = vpack.c.b16 %v1109, %v1106
        %v1323 = vpack.c.b16 %v1110, %v1107
        %v1324 = vpack.c.b16 %v1114, %v1111
        %v1325 = vpack.c.b16 %v1115, %v1112
        %v1326 = vpack.c.b16 %v1116, %v1113
        %v1327 = vpack.c.b16 %v1120, %v1117
        %v1328 = vpack.c.b16 %v1121, %v1118
        %v1329 = vpack.c.b16 %v1122, %v1119
        %v1330 = vpack.c.b16 %v1126, %v1123
        %v1331 = vpack.c.b16 %v1127, %v1124
        %v1332 = vpack.c.b16 %v1128, %v1125
        %v1333 = vpack.c.b16 %v1132, %v1129
        %v1334 = vpack.c.b16 %v1133, %v1130
        %v1335 = vpack.c.b16 %v1134, %v1131
        %v1336 = vpack.c.b16 %v1138, %v1135
        %v1337 = vpack.c.b16 %v1139, %v1136
        %v1338 = vpack.c.b16 %v1140, %v1137
        %v1339 = vpack.c.b16 %v1144, %v1141
        %v1340 = vpack.c.b16 %v1145, %v1142
        %v1341 = vpack.c.b16 %v1146, %v1143
        %v1342 = vpack.c.b16 %v1150, %v1147
        %v1343 = vpack.c.b16 %v1151, %v1148
        %v1344 = vpack.c.b16 %v1152, %v1149
        %v1345 = vpack.c.b16 %v1156, %v1153
        %v1346 = vpack.c.b16 %v1157, %v1154
        %v1347 = vpack.c.b16 %v1158, %v1155
        %v1348 = vpack.c.b16 %v1162, %v1159
        %v1349 = vpack.c.b16 %v1163, %v1160
        %v1350 = vpack.c.b16 %v1164, %v1161
        %v1351 = vpack.c.b16 %v1168, %v1165
        %v1352 = vpack.c.b16 %v1169, %v1166
        %v1353 = vpack.c.b16 %v1170, %v1167
        %v1354 = vpack.c.b16 %v1174, %v1171
        %v1355 = vpack.c.b16 %v1175, %v1172
        %v1356 = vpack.c.b16 %v1176, %v1173
        %v1357 = vpack.c.b16 %v1180, %v1177
        %v1358 = vpack.c.b16 %v1181, %v1178
        %v1359 = vpack.c.b16 %v1182, %v1179
        %v1360 = vpack.c.b16 %v1186, %v1183
        %v1361 = vpack.c.b16 %v1187, %v1184
        %v1362 = vpack.c.b16 %v1188, %v1185
        %v1363 = vpack.c.b16 %v1192, %v1189
        %v1364 = vpack.c.b16 %v1193, %v1190
        %v1365 = vpack.c.b16 %v1194, %v1191
        %v1366 = vpack.c.b16 %v1198, %v1195
        %v1367 = vpack.c.b16 %v1199, %v1196
        %v1368 = vpack.c.b16 %v1200, %v1197
        %v1369 = vpack.c.b16 %v1204, %v1201
        %v1370 = vpack.c.b16 %v1205, %v1202
        %v1371 = vpack.c.b16 %v1206, %v1203
        %v1372 = vpack.c.b16 %v1210, %v1207
        %v1373 = vpack.c.b16 %v1211, %v1208
        %v1374 = vpack.c.b16 %v1212, %v1209
        %v1375 = vpack.c.b16 %v1216, %v1213
        %v1376 = vpack.c.b16 %v1217, %v1214
        %v1377 = vpack.c.b16 %v1218, %v1215
        %v1378 = vpack.c.b16 %v1222, %v1219
        %v1379 = vpack.c.b16 %v1223, %v1220
        %v1380 = vpack.c.b16 %v1224, %v1221
        %v1381 = vpack.c.b16 %v1228, %v1225
        %v1382 = vpack.c.b16 %v1229, %v1226
        %v1383 = vpack.c.b16 %v1230, %v1227
        %v1384 = vpack.c.b16 %v1234, %v1231
        %v1385 = vpack.c.b16 %v1235, %v1232
        %v1386 = vpack.c.b16 %v1236, %v1233
        %v1387 = vpack.c.b16 %v1240, %v1237
        %v1388 = vpack.c.b16 %v1241, %v1238
        %v1389 = vpack.c.b16 %v1242, %v1239
        %v1390 = vpack.c.b16 %v1246, %v1243
        %v1391 = vpack.c.b16 %v1247, %v1244
        %v1392 = vpack.c.b16 %v1248, %v1245
        %v1393 = vpack.c.b16 %v1252, %v1249
        %v1394 = vpack.c.b16 %v1253, %v1250
        %v1395 = vpack.c.b16 %v1254, %v1251
        %v1396 = vpack.c.b16 %v1258, %v1255
        %v1397 = vpack.c.b16 %v1259, %v1256
        %v1398 = vpack.c.b16 %v1260, %v1257
        %v1399 = vpack.c.b16 %v1264, %v1261
        %v1400 = vpack.c.b16 %v1265, %v1262
        %v1401 = vpack.c.b16 %v1266, %v1263
        %v1402 = vpack.c.b16 %v1270, %v1267
        %v1403 = vpack.c.b16 %v1271, %v1268
        %v1404 = vpack.c.b16 %v1272, %v1269
        %v1405 = vpack.c.b16 %v1276, %v1273
        %v1406 = vpack.c.b16 %v1277, %v1274
        %v1407 = vpack.c.b16 %v1278, %v1275
        %v1408 = vpack.c.b16 %v1282, %v1279
        %v1409 = vpack.c.b16 %v1283, %v1280
        %v1410 = vpack.c.b16 %v1284, %v1281
        %v1411 = vpack.c.b16 %v1288, %v1285
        %v1412 = vpack.c.b16 %v1289, %v1286
        %v1413 = vpack.c.b16 %v1290, %v1287
        %v1414 = vpack.c.b16 %v1294, %v1291
        %v1415 = vpack.c.b16 %v1295, %v1292
        %v1416 = vpack.c.b16 %v1296, %v1293
        %1537 = vmatprep.subr.bf16.mxu0 %v1298
        %1538 = vmatpush1.bf16.msra.mxu0 %v1297
        %1539 = vmatprep.subr.bf16.mxu0 %v1301
        %1540 = vmatpush1.bf16.msra.mxu0 %v1300
        %1541 = vmatprep.subr.bf16.mxu0 %v1304
        %1542 = vmatpush1.bf16.msra.mxu0 %v1303
        %1543 = vmatprep.subr.bf16.mxu0 %v1307
        %1544 = vmatpush1.bf16.msra.mxu0 %v1306
        %1545 = vmatprep.subr.bf16.mxu0 %v1310
        %1546 = vmatpush1.bf16.msra.mxu0 %v1309
        %1547 = vmatprep.subr.bf16.mxu0 %v1313
        %1548 = vmatpush1.bf16.msra.mxu0 %v1312
        %1549 = vmatprep.subr.bf16.mxu0 %v1316
        %1550 = vmatpush1.bf16.msra.mxu0 %v1315
        %1551 = vmatprep.subr.bf16.mxu0 %v1319
        %1552 = vmatpush1.bf16.msra.mxu0 %v1318
        %1553 = vmatprep.subr.bf16.mxu0 %v1322
        %1554 = vmatpush1.bf16.msra.mxu0 %v1321
        %1555 = vmatprep.subr.bf16.mxu0 %v1325
        %1556 = vmatpush1.bf16.msra.mxu0 %v1324
        %1557 = vmatprep.subr.bf16.mxu0 %v1328
        %1558 = vmatpush1.bf16.msra.mxu0 %v1327
        %1559 = vmatprep.subr.bf16.mxu0 %v1331
        %1560 = vmatpush1.bf16.msra.mxu0 %v1330
        %1561 = vmatprep.subr.bf16.mxu0 %v1334
        %1562 = vmatpush1.bf16.msra.mxu0 %v1333
        %1563 = vmatprep.subr.bf16.mxu0 %v1337
        %1564 = vmatpush1.bf16.msra.mxu0 %v1336
        %1565 = vmatprep.subr.bf16.mxu0 %v1340
        %1566 = vmatpush1.bf16.msra.mxu0 %v1339
        %1567 = vmatprep.subr.bf16.mxu0 %v1343
        %1568 = vmatpush1.bf16.msra.mxu0 %v1342
        %1569 = vmatprep.mubr.bf16.mxu0 %v738
        %1570 = vmatmul.mubr.bf16.gmra.mrb[0].mxu0 %v737
        %v1571 = vpop.f32.mrb[0].mxu0
        %v1572 = vadd.f32 %v469, %v1571
        %v1573 = vpop.f32.mrb[0].mxu0
        %v1574 = vadd.f32 %v473, %v1573
        %v1575 = vpop.f32.mrb[0].mxu0
        %v1576 = vadd.f32 %v469, %v1575
        %v1577 = vpop.f32.mrb[0].mxu0
        %v1578 = vadd.f32 %v473, %v1577
        %1579 = vmatprep.mubr.bf16.mxu0 %v743
        %1580 = vmatmul.mubr.bf16.gmra.mrb[0].mxu0 %v742
        %v1581 = vpop.f32.mrb[0].mxu0
        %v1582 = vadd.f32 %v469, %v1581
        %v1583 = vpop.f32.mrb[0].mxu0
        %v1584 = vadd.f32 %v473, %v1583
        %v1585 = vpop.f32.mrb[0].mxu0
        %v1586 = vadd.f32 %v469, %v1585
        %v1587 = vpop.f32.mrb[0].mxu0
        %v1588 = vadd.f32 %v473, %v1587
        %1589 = vmatprep.mubr.bf16.mxu0 %v748
        %1590 = vmatmul.mubr.bf16.gmra.mrb[0].mxu0 %v747
        %v1591 = vpop.f32.mrb[0].mxu0
        %v1592 = vadd.f32 %v469, %v1591
        %v1593 = vpop.f32.mrb[0].mxu0
        %v1594 = vadd.f32 %v473, %v1593
        %v1595 = vpop.f32.mrb[0].mxu0
        %v1596 = vadd.f32 %v469, %v1595
        %v1597 = vpop.f32.mrb[0].mxu0
        %v1598 = vadd.f32 %v473, %v1597
        %1599 = vmatprep.mubr.bf16.mxu0 %v753
        %1600 = vmatmul.mubr.bf16.gmra.mrb[0].mxu0 %v752
        %v1601 = vpop.f32.mrb[0].mxu0
        %v1602 = vadd.f32 %v469, %v1601
        %v1603 = vpop.f32.mrb[0].mxu0
        %v1604 = vadd.f32 %v473, %v1603
        %v1605 = vpop.f32.mrb[0].mxu0
        %v1606 = vadd.f32 %v469, %v1605
        %v1607 = vpop.f32.mrb[0].mxu0
        %v1608 = vadd.f32 %v473, %v1607
        %1609 = vmatprep.mubr.bf16.mxu0 %v758
        %1610 = vmatmul.mubr.bf16.gmra.mrb[0].mxu0 %v757
        %v1611 = vpop.f32.mrb[0].mxu0
        %v1612 = vadd.f32 %v469, %v1611
        %v1613 = vpop.f32.mrb[0].mxu0
        %v1614 = vadd.f32 %v473, %v1613
        %v1615 = vpop.f32.mrb[0].mxu0
        %v1616 = vadd.f32 %v469, %v1615
        %v1617 = vpop.f32.mrb[0].mxu0
        %v1618 = vadd.f32 %v473, %v1617
        %1619 = vmatprep.mubr.bf16.mxu0 %v763
        %1620 = vmatmul.mubr.bf16.gmra.mrb[0].mxu0 %v762
        %v1621 = vpop.f32.mrb[0].mxu0
        %v1622 = vadd.f32 %v469, %v1621
        %v1623 = vpop.f32.mrb[0].mxu0
        %v1624 = vadd.f32 %v473, %v1623
        %v1625 = vpop.f32.mrb[0].mxu0
        %v1626 = vadd.f32 %v469, %v1625
        %v1627 = vpop.f32.mrb[0].mxu0
        %v1628 = vadd.f32 %v473, %v1627
        %1629 = vmatprep.mubr.bf16.mxu0 %v768
        %1630 = vmatmul.mubr.bf16.gmra.mrb[0].mxu0 %v767
        %v1631 = vpop.f32.mrb[0].mxu0
        %v1632 = vadd.f32 %v469, %v1631
        %v1633 = vpop.f32.mrb[0].mxu0
        %v1634 = vadd.f32 %v473, %v1633
        %v1635 = vpop.f32.mrb[0].mxu0
        %v1636 = vadd.f32 %v469, %v1635
        %v1637 = vpop.f32.mrb[0].mxu0
        %v1638 = vadd.f32 %v473, %v1637
        %1639 = vmatprep.mubr.bf16.mxu0 %v773
        %1640 = vmatmul.mubr.bf16.gmra.mrb[0].mxu0 %v772
        %v1641 = vpop.f32.mrb[0].mxu0
        %v1642 = vadd.f32 %v469, %v1641
        %v1643 = vpop.f32.mrb[0].mxu0
        %v1644 = vadd.f32 %v473, %v1643
        %v1645 = vpop.f32.mrb[0].mxu0
        %v1646 = vadd.f32 %v469, %v1645
        %v1647 = vpop.f32.mrb[0].mxu0
        %v1648 = vadd.f32 %v473, %v1647
        %1649 = vmatprep.mubr.bf16.mxu0 %v778
        %1650 = vmatmul.mubr.bf16.gmra.mrb[0].mxu0 %v777
        %v1651 = vpop.f32.mrb[0].mxu0
        %v1652 = vadd.f32 %v469, %v1651
        %v1653 = vpop.f32.mrb[0].mxu0
        %v1654 = vadd.f32 %v473, %v1653
        %v1655 = vpop.f32.mrb[0].mxu0
        %v1656 = vadd.f32 %v469, %v1655
        %v1657 = vpop.f32.mrb[0].mxu0
        %v1658 = vadd.f32 %v473, %v1657
        %1659 = vmatprep.mubr.bf16.mxu0 %v783
        %1660 = vmatmul.mubr.bf16.gmra.mrb[0].mxu0 %v782
        %v1661 = vpop.f32.mrb[0].mxu0
        %v1662 = vadd.f32 %v469, %v1661
        %v1663 = vpop.f32.mrb[0].mxu0
        %v1664 = vadd.f32 %v473, %v1663
        %v1665 = vpop.f32.mrb[0].mxu0
        %v1666 = vadd.f32 %v469, %v1665
        %v1667 = vpop.f32.mrb[0].mxu0
        %v1668 = vadd.f32 %v473, %v1667
        %1669 = vmatprep.mubr.bf16.mxu0 %v788
        %1670 = vmatmul.mubr.bf16.gmra.mrb[0].mxu0 %v787
        %v1671 = vpop.f32.mrb[0].mxu0
        %v1672 = vadd.f32 %v469, %v1671
        %v1673 = vpop.f32.mrb[0].mxu0
        %v1674 = vadd.f32 %v473, %v1673
        %v1675 = vpop.f32.mrb[0].mxu0
        %v1676 = vadd.f32 %v469, %v1675
        %v1677 = vpop.f32.mrb[0].mxu0
        %v1678 = vadd.f32 %v473, %v1677
        %1679 = vmatprep.mubr.bf16.mxu0 %v793
        %1680 = vmatmul.mubr.bf16.gmra.mrb[0].mxu0 %v792
        %v1681 = vpop.f32.mrb[0].mxu0
        %v1682 = vadd.f32 %v469, %v1681
        %v1683 = vpop.f32.mrb[0].mxu0
        %v1684 = vadd.f32 %v473, %v1683
        %v1685 = vpop.f32.mrb[0].mxu0
        %v1686 = vadd.f32 %v469, %v1685
        %v1687 = vpop.f32.mrb[0].mxu0
        %v1688 = vadd.f32 %v473, %v1687
        %1689 = vmatprep.mubr.bf16.mxu0 %v798
        %1690 = vmatmul.mubr.bf16.gmra.mrb[0].mxu0 %v797
        %v1691 = vpop.f32.mrb[0].mxu0
        %v1692 = vadd.f32 %v469, %v1691
        %v1693 = vpop.f32.mrb[0].mxu0
        %v1694 = vadd.f32 %v473, %v1693
        %v1695 = vpop.f32.mrb[0].mxu0
        %v1696 = vadd.f32 %v469, %v1695
        %v1697 = vpop.f32.mrb[0].mxu0
        %v1698 = vadd.f32 %v473, %v1697
        %1699 = vmatprep.mubr.bf16.mxu0 %v803
        %1700 = vmatmul.mubr.bf16.gmra.mrb[0].mxu0 %v802
        %v1701 = vpop.f32.mrb[0].mxu0
        %v1702 = vadd.f32 %v469, %v1701
        %v1703 = vpop.f32.mrb[0].mxu0
        %v1704 = vadd.f32 %v473, %v1703
        %v1705 = vpop.f32.mrb[0].mxu0
        %v1706 = vadd.f32 %v469, %v1705
        %v1707 = vpop.f32.mrb[0].mxu0
        %v1708 = vadd.f32 %v473, %v1707
        %1709 = vmatprep.mubr.bf16.mxu0 %v808
        %1710 = vmatmul.mubr.bf16.gmra.mrb[0].mxu0 %v807
        %v1711 = vpop.f32.mrb[0].mxu0
        %v1712 = vadd.f32 %v469, %v1711
        %v1713 = vpop.f32.mrb[0].mxu0
        %v1714 = vadd.f32 %v473, %v1713
        %v1715 = vpop.f32.mrb[0].mxu0
        %v1716 = vadd.f32 %v469, %v1715
        %v1717 = vpop.f32.mrb[0].mxu0
        %v1718 = vadd.f32 %v473, %v1717
        %1719 = vmatprep.mubr.bf16.mxu0 %v813
        %1720 = vmatmul.mubr.bf16.gmra.mrb[0].mxu0 %v812
        %v1721 = vpop.f32.mrb[0].mxu0
        %v1722 = vadd.f32 %v469, %v1721
        %v1723 = vpop.f32.mrb[0].mxu0
        %v1724 = vadd.f32 %v473, %v1723
        %v1725 = vpop.f32.mrb[0].mxu0
        %v1726 = vadd.f32 %v469, %v1725
        %v1727 = vpop.f32.mrb[0].mxu0
        %v1728 = vadd.f32 %v473, %v1727
        %1729 = vdwg.mxu0
        %1730 = vmatprep.subr.bf16.mxu0 %v1346
        %1731 = vmatpush1.bf16.msra.mxu0 %v1345
        %1732 = vmatprep.subr.bf16.mxu0 %v1349
        %1733 = vmatpush1.bf16.msra.mxu0 %v1348
        %1734 = vmatprep.subr.bf16.mxu0 %v1352
        %1735 = vmatpush1.bf16.msra.mxu0 %v1351
        %1736 = vmatprep.subr.bf16.mxu0 %v1355
        %1737 = vmatpush1.bf16.msra.mxu0 %v1354
        %1738 = vmatprep.subr.bf16.mxu0 %v1358
        %1739 = vmatpush1.bf16.msra.mxu0 %v1357
        %1740 = vmatprep.subr.bf16.mxu0 %v1361
        %1741 = vmatpush1.bf16.msra.mxu0 %v1360
        %1742 = vmatprep.subr.bf16.mxu0 %v1364
        %1743 = vmatpush1.bf16.msra.mxu0 %v1363
        %1744 = vmatprep.subr.bf16.mxu0 %v1367
        %1745 = vmatpush1.bf16.msra.mxu0 %v1366
        %1746 = vmatprep.subr.bf16.mxu0 %v1370
        %1747 = vmatpush1.bf16.msra.mxu0 %v1369
        %1748 = vmatprep.subr.bf16.mxu0 %v1373
        %1749 = vmatpush1.bf16.msra.mxu0 %v1372
        %1750 = vmatprep.subr.bf16.mxu0 %v1376
        %1751 = vmatpush1.bf16.msra.mxu0 %v1375
        %1752 = vmatprep.subr.bf16.mxu0 %v1379
        %1753 = vmatpush1.bf16.msra.mxu0 %v1378
        %1754 = vmatprep.subr.bf16.mxu0 %v1382
        %1755 = vmatpush1.bf16.msra.mxu0 %v1381
        %1756 = vmatprep.subr.bf16.mxu0 %v1385
        %1757 = vmatpush1.bf16.msra.mxu0 %v1384
        %1758 = vmatprep.subr.bf16.mxu0 %v1388
        %1759 = vmatpush1.bf16.msra.mxu0 %v1387
        %1760 = vmatprep.subr.bf16.mxu0 %v1391
        %1761 = vmatpush1.bf16.msra.mxu0 %v1390
        %1762 = vmatprep.mubr.bf16.mxu0 %v740
        %1763 = vmatmul.mubr.bf16.gmra.mrb[0].mxu0 %v739
        %v1764 = vpop.f32.mrb[0].mxu0
        %v1765 = vadd.f32 %v1572, %v1764
        %v1766 = vpop.f32.mrb[0].mxu0
        %v1767 = vadd.f32 %v1574, %v1766
        %v1768 = vpop.f32.mrb[0].mxu0
        %v1769 = vadd.f32 %v1576, %v1768
        %v1770 = vpop.f32.mrb[0].mxu0
        %v1771 = vadd.f32 %v1578, %v1770
        %1772 = vmatprep.mubr.bf16.mxu0 %v745
        %1773 = vmatmul.mubr.bf16.gmra.mrb[0].mxu0 %v744
        %v1774 = vpop.f32.mrb[0].mxu0
        %v1775 = vadd.f32 %v1582, %v1774
        %v1776 = vpop.f32.mrb[0].mxu0
        %v1777 = vadd.f32 %v1584, %v1776
        %v1778 = vpop.f32.mrb[0].mxu0
        %v1779 = vadd.f32 %v1586, %v1778
        %v1780 = vpop.f32.mrb[0].mxu0
        %v1781 = vadd.f32 %v1588, %v1780
        %1782 = vmatprep.mubr.bf16.mxu0 %v750
        %1783 = vmatmul.mubr.bf16.gmra.mrb[0].mxu0 %v749
        %v1784 = vpop.f32.mrb[0].mxu0
        %v1785 = vadd.f32 %v1592, %v1784
        %v1786 = vpop.f32.mrb[0].mxu0
        %v1787 = vadd.f32 %v1594, %v1786
        %v1788 = vpop.f32.mrb[0].mxu0
        %v1789 = vadd.f32 %v1596, %v1788
        %v1790 = vpop.f32.mrb[0].mxu0
        %v1791 = vadd.f32 %v1598, %v1790
        %1792 = vmatprep.mubr.bf16.mxu0 %v755
        %1793 = vmatmul.mubr.bf16.gmra.mrb[0].mxu0 %v754
        %v1794 = vpop.f32.mrb[0].mxu0
        %v1795 = vadd.f32 %v1602, %v1794
        %v1796 = vpop.f32.mrb[0].mxu0
        %v1797 = vadd.f32 %v1604, %v1796
        %v1798 = vpop.f32.mrb[0].mxu0
        %v1799 = vadd.f32 %v1606, %v1798
        %v1800 = vpop.f32.mrb[0].mxu0
        %v1801 = vadd.f32 %v1608, %v1800
        %1802 = vmatprep.mubr.bf16.mxu0 %v760
        %1803 = vmatmul.mubr.bf16.gmra.mrb[0].mxu0 %v759
        %v1804 = vpop.f32.mrb[0].mxu0
        %v1805 = vadd.f32 %v1612, %v1804
        %v1806 = vpop.f32.mrb[0].mxu0
        %v1807 = vadd.f32 %v1614, %v1806
        %v1808 = vpop.f32.mrb[0].mxu0
        %v1809 = vadd.f32 %v1616, %v1808
        %v1810 = vpop.f32.mrb[0].mxu0
        %v1811 = vadd.f32 %v1618, %v1810
        %1812 = vmatprep.mubr.bf16.mxu0 %v765
        %1813 = vmatmul.mubr.bf16.gmra.mrb[0].mxu0 %v764
        %v1814 = vpop.f32.mrb[0].mxu0
        %v1815 = vadd.f32 %v1622, %v1814
        %v1816 = vpop.f32.mrb[0].mxu0
        %v1817 = vadd.f32 %v1624, %v1816
        %v1818 = vpop.f32.mrb[0].mxu0
        %v1819 = vadd.f32 %v1626, %v1818
        %v1820 = vpop.f32.mrb[0].mxu0
        %v1821 = vadd.f32 %v1628, %v1820
        %1822 = vmatprep.mubr.bf16.mxu0 %v770
        %1823 = vmatmul.mubr.bf16.gmra.mrb[0].mxu0 %v769
        %v1824 = vpop.f32.mrb[0].mxu0
        %v1825 = vadd.f32 %v1632, %v1824
        %v1826 = vpop.f32.mrb[0].mxu0
        %v1827 = vadd.f32 %v1634, %v1826
        %v1828 = vpop.f32.mrb[0].mxu0
        %v1829 = vadd.f32 %v1636, %v1828
        %v1830 = vpop.f32.mrb[0].mxu0
        %v1831 = vadd.f32 %v1638, %v1830
        %1832 = vmatprep.mubr.bf16.mxu0 %v775
        %1833 = vmatmul.mubr.bf16.gmra.mrb[0].mxu0 %v774
        %v1834 = vpop.f32.mrb[0].mxu0
        %v1835 = vadd.f32 %v1642, %v1834
        %v1836 = vpop.f32.mrb[0].mxu0
        %v1837 = vadd.f32 %v1644, %v1836
        %v1838 = vpop.f32.mrb[0].mxu0
        %v1839 = vadd.f32 %v1646, %v1838
        %v1840 = vpop.f32.mrb[0].mxu0
        %v1841 = vadd.f32 %v1648, %v1840
        %1842 = vmatprep.mubr.bf16.mxu0 %v780
        %1843 = vmatmul.mubr.bf16.gmra.mrb[0].mxu0 %v779
        %v1844 = vpop.f32.mrb[0].mxu0
        %v1845 = vadd.f32 %v1652, %v1844
        %v1846 = vpop.f32.mrb[0].mxu0
        %v1847 = vadd.f32 %v1654, %v1846
        %v1848 = vpop.f32.mrb[0].mxu0
        %v1849 = vadd.f32 %v1656, %v1848
        %v1850 = vpop.f32.mrb[0].mxu0
        %v1851 = vadd.f32 %v1658, %v1850
        %1852 = vmatprep.mubr.bf16.mxu0 %v785
        %1853 = vmatmul.mubr.bf16.gmra.mrb[0].mxu0 %v784
        %v1854 = vpop.f32.mrb[0].mxu0
        %v1855 = vadd.f32 %v1662, %v1854
        %v1856 = vpop.f32.mrb[0].mxu0
        %v1857 = vadd.f32 %v1664, %v1856
        %v1858 = vpop.f32.mrb[0].mxu0
        %v1859 = vadd.f32 %v1666, %v1858
        %v1860 = vpop.f32.mrb[0].mxu0
        %v1861 = vadd.f32 %v1668, %v1860
        %1862 = vmatprep.mubr.bf16.mxu0 %v790
        %1863 = vmatmul.mubr.bf16.gmra.mrb[0].mxu0 %v789
        %v1864 = vpop.f32.mrb[0].mxu0
        %v1865 = vadd.f32 %v1672, %v1864
        %v1866 = vpop.f32.mrb[0].mxu0
        %v1867 = vadd.f32 %v1674, %v1866
        %v1868 = vpop.f32.mrb[0].mxu0
        %v1869 = vadd.f32 %v1676, %v1868
        %v1870 = vpop.f32.mrb[0].mxu0
        %v1871 = vadd.f32 %v1678, %v1870
        %1872 = vmatprep.mubr.bf16.mxu0 %v795
        %1873 = vmatmul.mubr.bf16.gmra.mrb[0].mxu0 %v794
        %v1874 = vpop.f32.mrb[0].mxu0
        %v1875 = vadd.f32 %v1682, %v1874
        %v1876 = vpop.f32.mrb[0].mxu0
        %v1877 = vadd.f32 %v1684, %v1876
        %v1878 = vpop.f32.mrb[0].mxu0
        %v1879 = vadd.f32 %v1686, %v1878
        %v1880 = vpop.f32.mrb[0].mxu0
        %v1881 = vadd.f32 %v1688, %v1880
        %1882 = vmatprep.mubr.bf16.mxu0 %v800
        %1883 = vmatmul.mubr.bf16.gmra.mrb[0].mxu0 %v799
        %v1884 = vpop.f32.mrb[0].mxu0
        %v1885 = vadd.f32 %v1692, %v1884
        %v1886 = vpop.f32.mrb[0].mxu0
        %v1887 = vadd.f32 %v1694, %v1886
        %v1888 = vpop.f32.mrb[0].mxu0
        %v1889 = vadd.f32 %v1696, %v1888
        %v1890 = vpop.f32.mrb[0].mxu0
        %v1891 = vadd.f32 %v1698, %v1890
        %1892 = vmatprep.mubr.bf16.mxu0 %v805
        %1893 = vmatmul.mubr.bf16.gmra.mrb[0].mxu0 %v804
        %v1894 = vpop.f32.mrb[0].mxu0
        %v1895 = vadd.f32 %v1702, %v1894
        %v1896 = vpop.f32.mrb[0].mxu0
        %v1897 = vadd.f32 %v1704, %v1896
        %v1898 = vpop.f32.mrb[0].mxu0
        %v1899 = vadd.f32 %v1706, %v1898
        %v1900 = vpop.f32.mrb[0].mxu0
        %v1901 = vadd.f32 %v1708, %v1900
        %1902 = vmatprep.mubr.bf16.mxu0 %v810
        %1903 = vmatmul.mubr.bf16.gmra.mrb[0].mxu0 %v809
        %v1904 = vpop.f32.mrb[0].mxu0
        %v1905 = vadd.f32 %v1712, %v1904
        %v1906 = vpop.f32.mrb[0].mxu0
        %v1907 = vadd.f32 %v1714, %v1906
        %v1908 = vpop.f32.mrb[0].mxu0
        %v1909 = vadd.f32 %v1716, %v1908
        %v1910 = vpop.f32.mrb[0].mxu0
        %v1911 = vadd.f32 %v1718, %v1910
        %1912 = vmatprep.mubr.bf16.mxu0 %v815
        %1913 = vmatmul.mubr.bf16.gmra.mrb[0].mxu0 %v814
        %v1914 = vpop.f32.mrb[0].mxu0
        %v1915 = vadd.f32 %v1722, %v1914
        %v1916 = vpop.f32.mrb[0].mxu0
        %v1917 = vadd.f32 %v1724, %v1916
        %v1918 = vpop.f32.mrb[0].mxu0
        %v1919 = vadd.f32 %v1726, %v1918
        %v1920 = vpop.f32.mrb[0].mxu0
        %v1921 = vadd.f32 %v1728, %v1920
        %1922 = vdwg.mxu0
        %1923 = vmatprep.subr.bf16.mxu0 %v1394
        %1924 = vmatpush1.bf16.msra.mxu0 %v1393
        %1925 = vmatprep.subr.bf16.mxu0 %v1397
        %1926 = vmatpush1.bf16.msra.mxu0 %v1396
        %1927 = vmatprep.subr.bf16.mxu0 %v1400
        %1928 = vmatpush1.bf16.msra.mxu0 %v1399
        %1929 = vmatprep.subr.bf16.mxu0 %v1403
        %1930 = vmatpush1.bf16.msra.mxu0 %v1402
        %1931 = vmatprep.subr.bf16.mxu0 %v1406
        %1932 = vmatpush1.bf16.msra.mxu0 %v1405
        %1933 = vmatprep.subr.bf16.mxu0 %v1409
        %1934 = vmatpush1.bf16.msra.mxu0 %v1408
        %1935 = vmatprep.subr.bf16.mxu0 %v1412
        %1936 = vmatpush1.bf16.msra.mxu0 %v1411
        %1937 = vmatprep.subr.bf16.mxu0 %v1415
        %1938 = vmatpush1.bf16.msra.mxu0 %v1414
        %1939 = vmatprep.subr.bf16.mxu0 0
        %1940 = vmatpush1.bf16.msra.mxu0 0
        %1941 = vmatprep.subr.bf16.mxu0 0
        %1942 = vmatpush1.bf16.msra.mxu0 0
        %1943 = vmatprep.subr.bf16.mxu0 0
        %1944 = vmatpush1.bf16.msra.mxu0 0
        %1945 = vmatprep.subr.bf16.mxu0 0
        %1946 = vmatpush1.bf16.msra.mxu0 0
        %1947 = vmatprep.subr.bf16.mxu0 0
        %1948 = vmatpush1.bf16.msra.mxu0 0
        %1949 = vmatprep.subr.bf16.mxu0 0
        %1950 = vmatpush1.bf16.msra.mxu0 0
        %1951 = vmatprep.subr.bf16.mxu0 0
        %1952 = vmatpush1.bf16.msra.mxu0 0
        %1953 = vmatprep.subr.bf16.mxu0 0
        %1954 = vmatpush1.bf16.msra.mxu0 0
        %1955 = vmatprep.mubr.bf16.mxu0 0
        %1956 = vmatmul.mubr.bf16.gmra.mrb[0].mxu0 %v741
        %v1957 = vpop.f32.mrb[0].mxu0
        %v1958 = vadd.f32 %v1765, %v1957
        %v1959 = vpop.f32.mrb[0].mxu0
        %v1960 = vadd.f32 %v1767, %v1959
        %v1961 = vpop.f32.mrb[0].mxu0
        %v1962 = vadd.f32 %v1769, %v1961
        %v1963 = vpop.f32.mrb[0].mxu0
        %v1964 = vadd.f32 %v1771, %v1963
        %1965 = vmatprep.mubr.bf16.mxu0 0
        %1966 = vmatmul.mubr.bf16.gmra.mrb[0].mxu0 %v746
        %v1967 = vpop.f32.mrb[0].mxu0
        %v1968 = vadd.f32 %v1775, %v1967
        %v1969 = vpop.f32.mrb[0].mxu0
        %v1970 = vadd.f32 %v1777, %v1969
        %v1971 = vpop.f32.mrb[0].mxu0
        %v1972 = vadd.f32 %v1779, %v1971
        %v1973 = vpop.f32.mrb[0].mxu0
        %v1974 = vadd.f32 %v1781, %v1973
        %1975 = vmatprep.mubr.bf16.mxu0 0
        %1976 = vmatmul.mubr.bf16.gmra.mrb[0].mxu0 %v751
        %v1977 = vpop.f32.mrb[0].mxu0
        %v1978 = vadd.f32 %v1785, %v1977
        %v1979 = vpop.f32.mrb[0].mxu0
        %v1980 = vadd.f32 %v1787, %v1979
        %v1981 = vpop.f32.mrb[0].mxu0
        %v1982 = vadd.f32 %v1789, %v1981
        %v1983 = vpop.f32.mrb[0].mxu0
        %v1984 = vadd.f32 %v1791, %v1983
        %1985 = vmatprep.mubr.bf16.mxu0 0
        %1986 = vmatmul.mubr.bf16.gmra.mrb[0].mxu0 %v756
        %v1987 = vpop.f32.mrb[0].mxu0
        %v1988 = vadd.f32 %v1795, %v1987
        %v1989 = vpop.f32.mrb[0].mxu0
        %v1990 = vadd.f32 %v1797, %v1989
        %v1991 = vpop.f32.mrb[0].mxu0
        %v1992 = vadd.f32 %v1799, %v1991
        %v1993 = vpop.f32.mrb[0].mxu0
        %v1994 = vadd.f32 %v1801, %v1993
        %1995 = vmatprep.mubr.bf16.mxu0 0
        %1996 = vmatmul.mubr.bf16.gmra.mrb[0].mxu0 %v761
        %v1997 = vpop.f32.mrb[0].mxu0
        %v1998 = vadd.f32 %v1805, %v1997
        %v1999 = vpop.f32.mrb[0].mxu0
        %v2000 = vadd.f32 %v1807, %v1999
        %v2001 = vpop.f32.mrb[0].mxu0
        %v2002 = vadd.f32 %v1809, %v2001
        %v2003 = vpop.f32.mrb[0].mxu0
        %v2004 = vadd.f32 %v1811, %v2003
        %2005 = vmatprep.mubr.bf16.mxu0 0
        %2006 = vmatmul.mubr.bf16.gmra.mrb[0].mxu0 %v766
        %v2007 = vpop.f32.mrb[0].mxu0
        %v2008 = vadd.f32 %v1815, %v2007
        %v2009 = vpop.f32.mrb[0].mxu0
        %v2010 = vadd.f32 %v1817, %v2009
        %v2011 = vpop.f32.mrb[0].mxu0
        %v2012 = vadd.f32 %v1819, %v2011
        %v2013 = vpop.f32.mrb[0].mxu0
        %v2014 = vadd.f32 %v1821, %v2013
        %2015 = vmatprep.mubr.bf16.mxu0 0
        %2016 = vmatmul.mubr.bf16.gmra.mrb[0].mxu0 %v771
        %v2017 = vpop.f32.mrb[0].mxu0
        %v2018 = vadd.f32 %v1825, %v2017
        %v2019 = vpop.f32.mrb[0].mxu0
        %v2020 = vadd.f32 %v1827, %v2019
        %v2021 = vpop.f32.mrb[0].mxu0
        %v2022 = vadd.f32 %v1829, %v2021
        %v2023 = vpop.f32.mrb[0].mxu0
        %v2024 = vadd.f32 %v1831, %v2023
        %2025 = vmatprep.mubr.bf16.mxu0 0
        %2026 = vmatmul.mubr.bf16.gmra.mrb[0].mxu0 %v776
        %v2027 = vpop.f32.mrb[0].mxu0
        %v2028 = vadd.f32 %v1835, %v2027
        %v2029 = vpop.f32.mrb[0].mxu0
        %v2030 = vadd.f32 %v1837, %v2029
        %v2031 = vpop.f32.mrb[0].mxu0
        %v2032 = vadd.f32 %v1839, %v2031
        %v2033 = vpop.f32.mrb[0].mxu0
        %v2034 = vadd.f32 %v1841, %v2033
        %2035 = vmatprep.mubr.bf16.mxu0 0
        %2036 = vmatmul.mubr.bf16.gmra.mrb[0].mxu0 %v781
        %v2037 = vpop.f32.mrb[0].mxu0
        %v2038 = vadd.f32 %v1845, %v2037
        %v2039 = vpop.f32.mrb[0].mxu0
        %v2040 = vadd.f32 %v1847, %v2039
        %v2041 = vpop.f32.mrb[0].mxu0
        %v2042 = vadd.f32 %v1849, %v2041
        %v2043 = vpop.f32.mrb[0].mxu0
        %v2044 = vadd.f32 %v1851, %v2043
        %2045 = vmatprep.mubr.bf16.mxu0 0
        %2046 = vmatmul.mubr.bf16.gmra.mrb[0].mxu0 %v786
        %v2047 = vpop.f32.mrb[0].mxu0
        %v2048 = vadd.f32 %v1855, %v2047
        %v2049 = vpop.f32.mrb[0].mxu0
        %v2050 = vadd.f32 %v1857, %v2049
        %v2051 = vpop.f32.mrb[0].mxu0
        %v2052 = vadd.f32 %v1859, %v2051
        %v2053 = vpop.f32.mrb[0].mxu0
        %v2054 = vadd.f32 %v1861, %v2053
        %2055 = vmatprep.mubr.bf16.mxu0 0
        %2056 = vmatmul.mubr.bf16.gmra.mrb[0].mxu0 %v791
        %v2057 = vpop.f32.mrb[0].mxu0
        %v2058 = vadd.f32 %v1865, %v2057
        %v2059 = vpop.f32.mrb[0].mxu0
        %v2060 = vadd.f32 %v1867, %v2059
        %v2061 = vpop.f32.mrb[0].mxu0
        %v2062 = vadd.f32 %v1869, %v2061
        %v2063 = vpop.f32.mrb[0].mxu0
        %v2064 = vadd.f32 %v1871, %v2063
        %2065 = vmatprep.mubr.bf16.mxu0 0
        %2066 = vmatmul.mubr.bf16.gmra.mrb[0].mxu0 %v796
        %v2067 = vpop.f32.mrb[0].mxu0
        %v2068 = vadd.f32 %v1875, %v2067
        %v2069 = vpop.f32.mrb[0].mxu0
        %v2070 = vadd.f32 %v1877, %v2069
        %v2071 = vpop.f32.mrb[0].mxu0
        %v2072 = vadd.f32 %v1879, %v2071
        %v2073 = vpop.f32.mrb[0].mxu0
        %v2074 = vadd.f32 %v1881, %v2073
        %2075 = vmatprep.mubr.bf16.mxu0 0
        %2076 = vmatmul.mubr.bf16.gmra.mrb[0].mxu0 %v801
        %v2077 = vpop.f32.mrb[0].mxu0
        %v2078 = vadd.f32 %v1885, %v2077
        %v2079 = vpop.f32.mrb[0].mxu0
        %v2080 = vadd.f32 %v1887, %v2079
        %v2081 = vpop.f32.mrb[0].mxu0
        %v2082 = vadd.f32 %v1889, %v2081
        %v2083 = vpop.f32.mrb[0].mxu0
        %v2084 = vadd.f32 %v1891, %v2083
        %2085 = vmatprep.mubr.bf16.mxu0 0
        %2086 = vmatmul.mubr.bf16.gmra.mrb[0].mxu0 %v806
        %v2087 = vpop.f32.mrb[0].mxu0
        %v2088 = vadd.f32 %v1895, %v2087
        %v2089 = vpop.f32.mrb[0].mxu0
        %v2090 = vadd.f32 %v1897, %v2089
        %v2091 = vpop.f32.mrb[0].mxu0
        %v2092 = vadd.f32 %v1899, %v2091
        %v2093 = vpop.f32.mrb[0].mxu0
        %v2094 = vadd.f32 %v1901, %v2093
        %2095 = vmatprep.mubr.bf16.mxu0 0
        %2096 = vmatmul.mubr.bf16.gmra.mrb[0].mxu0 %v811
        %v2097 = vpop.f32.mrb[0].mxu0
        %v2098 = vadd.f32 %v1905, %v2097
        %v2099 = vpop.f32.mrb[0].mxu0
        %v2100 = vadd.f32 %v1907, %v2099
        %v2101 = vpop.f32.mrb[0].mxu0
        %v2102 = vadd.f32 %v1909, %v2101
        %v2103 = vpop.f32.mrb[0].mxu0
        %v2104 = vadd.f32 %v1911, %v2103
        %2105 = vmatprep.mubr.bf16.mxu0 0
        %2106 = vmatmul.mubr.bf16.gmra.mrb[0].mxu0 %v816
        %v2107 = vpop.f32.mrb[0].mxu0
        %v2108 = vadd.f32 %v1915, %v2107
        %v2109 = vpop.f32.mrb[0].mxu0
        %v2110 = vadd.f32 %v1917, %v2109
        %v2111 = vpop.f32.mrb[0].mxu0
        %v2112 = vadd.f32 %v1919, %v2111
        %v2113 = vpop.f32.mrb[0].mxu0
        %v2114 = vadd.f32 %v1921, %v2113
        %2115 = vdwg.mxu0
        %2116 = vmatprep.subr.bf16.mxu0 0
        %2117 = vmatpush1.bf16.msra.mxu0 %v1299
        %2118 = vmatprep.subr.bf16.mxu0 0
        %2119 = vmatpush1.bf16.msra.mxu0 %v1302
        %2120 = vmatprep.subr.bf16.mxu0 0
        %2121 = vmatpush1.bf16.msra.mxu0 %v1305
        %2122 = vmatprep.subr.bf16.mxu0 0
        %2123 = vmatpush1.bf16.msra.mxu0 %v1308
        %2124 = vmatprep.subr.bf16.mxu0 0
        %2125 = vmatpush1.bf16.msra.mxu0 %v1311
        %2126 = vmatprep.subr.bf16.mxu0 0
        %2127 = vmatpush1.bf16.msra.mxu0 %v1314
        %2128 = vmatprep.subr.bf16.mxu0 0
        %2129 = vmatpush1.bf16.msra.mxu0 %v1317
        %2130 = vmatprep.subr.bf16.mxu0 0
        %2131 = vmatpush1.bf16.msra.mxu0 %v1320
        %2132 = vmatprep.subr.bf16.mxu0 0
        %2133 = vmatpush1.bf16.msra.mxu0 %v1323
        %2134 = vmatprep.subr.bf16.mxu0 0
        %2135 = vmatpush1.bf16.msra.mxu0 %v1326
        %2136 = vmatprep.subr.bf16.mxu0 0
        %2137 = vmatpush1.bf16.msra.mxu0 %v1329
        %2138 = vmatprep.subr.bf16.mxu0 0
        %2139 = vmatpush1.bf16.msra.mxu0 %v1332
        %2140 = vmatprep.subr.bf16.mxu0 0
        %2141 = vmatpush1.bf16.msra.mxu0 %v1335
        %2142 = vmatprep.subr.bf16.mxu0 0
        %2143 = vmatpush1.bf16.msra.mxu0 %v1338
        %2144 = vmatprep.subr.bf16.mxu0 0
        %2145 = vmatpush1.bf16.msra.mxu0 %v1341
        %2146 = vmatprep.subr.bf16.mxu0 0
        %2147 = vmatpush1.bf16.msra.mxu0 %v1344
        %2148 = vmatprep.mubr.bf16.mxu0 %v738
        %2149 = vmatmul.mubr.bf16.gmra.mrb[0].mxu0 %v737
        %v2150 = vpop.f32.mrb[0].mxu0
        %v2151 = vadd.f32 %v477, %v2150
        %v2152 = vpop.f32.mrb[0].mxu0
        %v2153 = vpop.f32.mrb[0].mxu0
        %v2154 = vadd.f32 %v477, %v2153
        %v2155 = vpop.f32.mrb[0].mxu0
        %2156 = vmatprep.mubr.bf16.mxu0 %v743
        %2157 = vmatmul.mubr.bf16.gmra.mrb[0].mxu0 %v742
        %v2158 = vpop.f32.mrb[0].mxu0
        %v2159 = vadd.f32 %v477, %v2158
        %v2160 = vpop.f32.mrb[0].mxu0
        %v2161 = vpop.f32.mrb[0].mxu0
        %v2162 = vadd.f32 %v477, %v2161
        %v2163 = vpop.f32.mrb[0].mxu0
        %2164 = vmatprep.mubr.bf16.mxu0 %v748
        %2165 = vmatmul.mubr.bf16.gmra.mrb[0].mxu0 %v747
        %v2166 = vpop.f32.mrb[0].mxu0
        %v2167 = vadd.f32 %v477, %v2166
        %v2168 = vpop.f32.mrb[0].mxu0
        %v2169 = vpop.f32.mrb[0].mxu0
        %v2170 = vadd.f32 %v477, %v2169
        %v2171 = vpop.f32.mrb[0].mxu0
        %2172 = vmatprep.mubr.bf16.mxu0 %v753
        %2173 = vmatmul.mubr.bf16.gmra.mrb[0].mxu0 %v752
        %v2174 = vpop.f32.mrb[0].mxu0
        %v2175 = vadd.f32 %v477, %v2174
        %v2176 = vpop.f32.mrb[0].mxu0
        %v2177 = vpop.f32.mrb[0].mxu0
        %v2178 = vadd.f32 %v477, %v2177
        %v2179 = vpop.f32.mrb[0].mxu0
        %2180 = vmatprep.mubr.bf16.mxu0 %v758
        %2181 = vmatmul.mubr.bf16.gmra.mrb[0].mxu0 %v757
        %v2182 = vpop.f32.mrb[0].mxu0
        %v2183 = vadd.f32 %v477, %v2182
        %v2184 = vpop.f32.mrb[0].mxu0
        %v2185 = vpop.f32.mrb[0].mxu0
        %v2186 = vadd.f32 %v477, %v2185
        %v2187 = vpop.f32.mrb[0].mxu0
        %2188 = vmatprep.mubr.bf16.mxu0 %v763
        %2189 = vmatmul.mubr.bf16.gmra.mrb[0].mxu0 %v762
        %v2190 = vpop.f32.mrb[0].mxu0
        %v2191 = vadd.f32 %v477, %v2190
        %v2192 = vpop.f32.mrb[0].mxu0
        %v2193 = vpop.f32.mrb[0].mxu0
        %v2194 = vadd.f32 %v477, %v2193
        %v2195 = vpop.f32.mrb[0].mxu0
        %2196 = vmatprep.mubr.bf16.mxu0 %v768
        %2197 = vmatmul.mubr.bf16.gmra.mrb[0].mxu0 %v767
        %v2198 = vpop.f32.mrb[0].mxu0
        %v2199 = vadd.f32 %v477, %v2198
        %v2200 = vpop.f32.mrb[0].mxu0
        %v2201 = vpop.f32.mrb[0].mxu0
        %v2202 = vadd.f32 %v477, %v2201
        %v2203 = vpop.f32.mrb[0].mxu0
        %2204 = vmatprep.mubr.bf16.mxu0 %v773
        %2205 = vmatmul.mubr.bf16.gmra.mrb[0].mxu0 %v772
        %v2206 = vpop.f32.mrb[0].mxu0
        %v2207 = vadd.f32 %v477, %v2206
        %v2208 = vpop.f32.mrb[0].mxu0
        %v2209 = vpop.f32.mrb[0].mxu0
        %v2210 = vadd.f32 %v477, %v2209
        %v2211 = vpop.f32.mrb[0].mxu0
        %2212 = vmatprep.mubr.bf16.mxu0 %v778
        %2213 = vmatmul.mubr.bf16.gmra.mrb[0].mxu0 %v777
        %v2214 = vpop.f32.mrb[0].mxu0
        %v2215 = vadd.f32 %v477, %v2214
        %v2216 = vpop.f32.mrb[0].mxu0
        %v2217 = vpop.f32.mrb[0].mxu0
        %v2218 = vadd.f32 %v477, %v2217
        %v2219 = vpop.f32.mrb[0].mxu0
        %2220 = vmatprep.mubr.bf16.mxu0 %v783
        %2221 = vmatmul.mubr.bf16.gmra.mrb[0].mxu0 %v782
        %v2222 = vpop.f32.mrb[0].mxu0
        %v2223 = vadd.f32 %v477, %v2222
        %v2224 = vpop.f32.mrb[0].mxu0
        %v2225 = vpop.f32.mrb[0].mxu0
        %v2226 = vadd.f32 %v477, %v2225
        %v2227 = vpop.f32.mrb[0].mxu0
        %2228 = vmatprep.mubr.bf16.mxu0 %v788
        %2229 = vmatmul.mubr.bf16.gmra.mrb[0].mxu0 %v787
        %v2230 = vpop.f32.mrb[0].mxu0
        %v2231 = vadd.f32 %v477, %v2230
        %v2232 = vpop.f32.mrb[0].mxu0
        %v2233 = vpop.f32.mrb[0].mxu0
        %v2234 = vadd.f32 %v477, %v2233
        %v2235 = vpop.f32.mrb[0].mxu0
        %2236 = vmatprep.mubr.bf16.mxu0 %v793
        %2237 = vmatmul.mubr.bf16.gmra.mrb[0].mxu0 %v792
        %v2238 = vpop.f32.mrb[0].mxu0
        %v2239 = vadd.f32 %v477, %v2238
        %v2240 = vpop.f32.mrb[0].mxu0
        %v2241 = vpop.f32.mrb[0].mxu0
        %v2242 = vadd.f32 %v477, %v2241
        %v2243 = vpop.f32.mrb[0].mxu0
        %2244 = vmatprep.mubr.bf16.mxu0 %v798
        %2245 = vmatmul.mubr.bf16.gmra.mrb[0].mxu0 %v797
        %v2246 = vpop.f32.mrb[0].mxu0
        %v2247 = vadd.f32 %v477, %v2246
        %v2248 = vpop.f32.mrb[0].mxu0
        %v2249 = vpop.f32.mrb[0].mxu0
        %v2250 = vadd.f32 %v477, %v2249
        %v2251 = vpop.f32.mrb[0].mxu0
        %2252 = vmatprep.mubr.bf16.mxu0 %v803
        %2253 = vmatmul.mubr.bf16.gmra.mrb[0].mxu0 %v802
        %v2254 = vpop.f32.mrb[0].mxu0
        %v2255 = vadd.f32 %v477, %v2254
        %v2256 = vpop.f32.mrb[0].mxu0
        %v2257 = vpop.f32.mrb[0].mxu0
        %v2258 = vadd.f32 %v477, %v2257
        %v2259 = vpop.f32.mrb[0].mxu0
        %2260 = vmatprep.mubr.bf16.mxu0 %v808
        %2261 = vmatmul.mubr.bf16.gmra.mrb[0].mxu0 %v807
        %v2262 = vpop.f32.mrb[0].mxu0
        %v2263 = vadd.f32 %v477, %v2262
        %v2264 = vpop.f32.mrb[0].mxu0
        %v2265 = vpop.f32.mrb[0].mxu0
        %v2266 = vadd.f32 %v477, %v2265
        %v2267 = vpop.f32.mrb[0].mxu0
        %2268 = vmatprep.mubr.bf16.mxu0 %v813
        %2269 = vmatmul.mubr.bf16.gmra.mrb[0].mxu0 %v812
        %v2270 = vpop.f32.mrb[0].mxu0
        %v2271 = vadd.f32 %v477, %v2270
        %v2272 = vpop.f32.mrb[0].mxu0
        %v2273 = vpop.f32.mrb[0].mxu0
        %v2274 = vadd.f32 %v477, %v2273
        %v2275 = vpop.f32.mrb[0].mxu0
        %2276 = vdwg.mxu0
        %2277 = vmatprep.subr.bf16.mxu0 0
        %2278 = vmatpush1.bf16.msra.mxu0 %v1347
        %2279 = vmatprep.subr.bf16.mxu0 0
        %2280 = vmatpush1.bf16.msra.mxu0 %v1350
        %2281 = vmatprep.subr.bf16.mxu0 0
        %2282 = vmatpush1.bf16.msra.mxu0 %v1353
        %2283 = vmatprep.subr.bf16.mxu0 0
        %2284 = vmatpush1.bf16.msra.mxu0 %v1356
        %2285 = vmatprep.subr.bf16.mxu0 0
        %2286 = vmatpush1.bf16.msra.mxu0 %v1359
        %2287 = vmatprep.subr.bf16.mxu0 0
        %2288 = vmatpush1.bf16.msra.mxu0 %v1362
        %2289 = vmatprep.subr.bf16.mxu0 0
        %2290 = vmatpush1.bf16.msra.mxu0 %v1365
        %2291 = vmatprep.subr.bf16.mxu0 0
        %2292 = vmatpush1.bf16.msra.mxu0 %v1368
        %2293 = vmatprep.subr.bf16.mxu0 0
        %2294 = vmatpush1.bf16.msra.mxu0 %v1371
        %2295 = vmatprep.subr.bf16.mxu0 0
        %2296 = vmatpush1.bf16.msra.mxu0 %v1374
        %2297 = vmatprep.subr.bf16.mxu0 0
        %2298 = vmatpush1.bf16.msra.mxu0 %v1377
        %2299 = vmatprep.subr.bf16.mxu0 0
        %2300 = vmatpush1.bf16.msra.mxu0 %v1380
        %2301 = vmatprep.subr.bf16.mxu0 0
        %2302 = vmatpush1.bf16.msra.mxu0 %v1383
        %2303 = vmatprep.subr.bf16.mxu0 0
        %2304 = vmatpush1.bf16.msra.mxu0 %v1386
        %2305 = vmatprep.subr.bf16.mxu0 0
        %2306 = vmatpush1.bf16.msra.mxu0 %v1389
        %2307 = vmatprep.subr.bf16.mxu0 0
        %2308 = vmatpush1.bf16.msra.mxu0 %v1392
        %2309 = vmatprep.mubr.bf16.mxu0 %v740
        %2310 = vmatmul.mubr.bf16.gmra.mrb[0].mxu0 %v739
        %v2311 = vpop.f32.mrb[0].mxu0
        %v2312 = vadd.f32 %v2151, %v2311
        %v2313 = vpop.f32.mrb[0].mxu0
        %v2314 = vpop.f32.mrb[0].mxu0
        %v2315 = vadd.f32 %v2154, %v2314
        %v2316 = vpop.f32.mrb[0].mxu0
        %2317 = vmatprep.mubr.bf16.mxu0 %v745
        %2318 = vmatmul.mubr.bf16.gmra.mrb[0].mxu0 %v744
        %v2319 = vpop.f32.mrb[0].mxu0
        %v2320 = vadd.f32 %v2159, %v2319
        %v2321 = vpop.f32.mrb[0].mxu0
        %v2322 = vpop.f32.mrb[0].mxu0
        %v2323 = vadd.f32 %v2162, %v2322
        %v2324 = vpop.f32.mrb[0].mxu0
        %2325 = vmatprep.mubr.bf16.mxu0 %v750
        %2326 = vmatmul.mubr.bf16.gmra.mrb[0].mxu0 %v749
        %v2327 = vpop.f32.mrb[0].mxu0
        %v2328 = vadd.f32 %v2167, %v2327
        %v2329 = vpop.f32.mrb[0].mxu0
        %v2330 = vpop.f32.mrb[0].mxu0
        %v2331 = vadd.f32 %v2170, %v2330
        %v2332 = vpop.f32.mrb[0].mxu0
        %2333 = vmatprep.mubr.bf16.mxu0 %v755
        %2334 = vmatmul.mubr.bf16.gmra.mrb[0].mxu0 %v754
        %v2335 = vpop.f32.mrb[0].mxu0
        %v2336 = vadd.f32 %v2175, %v2335
        %v2337 = vpop.f32.mrb[0].mxu0
        %v2338 = vpop.f32.mrb[0].mxu0
        %v2339 = vadd.f32 %v2178, %v2338
        %v2340 = vpop.f32.mrb[0].mxu0
        %2341 = vmatprep.mubr.bf16.mxu0 %v760
        %2342 = vmatmul.mubr.bf16.gmra.mrb[0].mxu0 %v759
        %v2343 = vpop.f32.mrb[0].mxu0
        %v2344 = vadd.f32 %v2183, %v2343
        %v2345 = vpop.f32.mrb[0].mxu0
        %v2346 = vpop.f32.mrb[0].mxu0
        %v2347 = vadd.f32 %v2186, %v2346
        %v2348 = vpop.f32.mrb[0].mxu0
        %2349 = vmatprep.mubr.bf16.mxu0 %v765
        %2350 = vmatmul.mubr.bf16.gmra.mrb[0].mxu0 %v764
        %v2351 = vpop.f32.mrb[0].mxu0
        %v2352 = vadd.f32 %v2191, %v2351
        %v2353 = vpop.f32.mrb[0].mxu0
        %v2354 = vpop.f32.mrb[0].mxu0
        %v2355 = vadd.f32 %v2194, %v2354
        %v2356 = vpop.f32.mrb[0].mxu0
        %2357 = vmatprep.mubr.bf16.mxu0 %v770
        %2358 = vmatmul.mubr.bf16.gmra.mrb[0].mxu0 %v769
        %v2359 = vpop.f32.mrb[0].mxu0
        %v2360 = vadd.f32 %v2199, %v2359
        %v2361 = vpop.f32.mrb[0].mxu0
        %v2362 = vpop.f32.mrb[0].mxu0
        %v2363 = vadd.f32 %v2202, %v2362
        %v2364 = vpop.f32.mrb[0].mxu0
        %2365 = vmatprep.mubr.bf16.mxu0 %v775
        %2366 = vmatmul.mubr.bf16.gmra.mrb[0].mxu0 %v774
        %v2367 = vpop.f32.mrb[0].mxu0
        %v2368 = vadd.f32 %v2207, %v2367
        %v2369 = vpop.f32.mrb[0].mxu0
        %v2370 = vpop.f32.mrb[0].mxu0
        %v2371 = vadd.f32 %v2210, %v2370
        %v2372 = vpop.f32.mrb[0].mxu0
        %2373 = vmatprep.mubr.bf16.mxu0 %v780
        %2374 = vmatmul.mubr.bf16.gmra.mrb[0].mxu0 %v779
        %v2375 = vpop.f32.mrb[0].mxu0
        %v2376 = vadd.f32 %v2215, %v2375
        %v2377 = vpop.f32.mrb[0].mxu0
        %v2378 = vpop.f32.mrb[0].mxu0
        %v2379 = vadd.f32 %v2218, %v2378
        %v2380 = vpop.f32.mrb[0].mxu0
        %2381 = vmatprep.mubr.bf16.mxu0 %v785
        %2382 = vmatmul.mubr.bf16.gmra.mrb[0].mxu0 %v784
        %v2383 = vpop.f32.mrb[0].mxu0
        %v2384 = vadd.f32 %v2223, %v2383
        %v2385 = vpop.f32.mrb[0].mxu0
        %v2386 = vpop.f32.mrb[0].mxu0
        %v2387 = vadd.f32 %v2226, %v2386
        %v2388 = vpop.f32.mrb[0].mxu0
        %2389 = vmatprep.mubr.bf16.mxu0 %v790
        %2390 = vmatmul.mubr.bf16.gmra.mrb[0].mxu0 %v789
        %v2391 = vpop.f32.mrb[0].mxu0
        %v2392 = vadd.f32 %v2231, %v2391
        %v2393 = vpop.f32.mrb[0].mxu0
        %v2394 = vpop.f32.mrb[0].mxu0
        %v2395 = vadd.f32 %v2234, %v2394
        %v2396 = vpop.f32.mrb[0].mxu0
        %2397 = vmatprep.mubr.bf16.mxu0 %v795
        %2398 = vmatmul.mubr.bf16.gmra.mrb[0].mxu0 %v794
        %v2399 = vpop.f32.mrb[0].mxu0
        %v2400 = vadd.f32 %v2239, %v2399
        %v2401 = vpop.f32.mrb[0].mxu0
        %v2402 = vpop.f32.mrb[0].mxu0
        %v2403 = vadd.f32 %v2242, %v2402
        %v2404 = vpop.f32.mrb[0].mxu0
        %2405 = vmatprep.mubr.bf16.mxu0 %v800
        %2406 = vmatmul.mubr.bf16.gmra.mrb[0].mxu0 %v799
        %v2407 = vpop.f32.mrb[0].mxu0
        %v2408 = vadd.f32 %v2247, %v2407
        %v2409 = vpop.f32.mrb[0].mxu0
        %v2410 = vpop.f32.mrb[0].mxu0
        %v2411 = vadd.f32 %v2250, %v2410
        %v2412 = vpop.f32.mrb[0].mxu0
        %2413 = vmatprep.mubr.bf16.mxu0 %v805
        %2414 = vmatmul.mubr.bf16.gmra.mrb[0].mxu0 %v804
        %v2415 = vpop.f32.mrb[0].mxu0
        %v2416 = vadd.f32 %v2255, %v2415
        %v2417 = vpop.f32.mrb[0].mxu0
        %v2418 = vpop.f32.mrb[0].mxu0
        %v2419 = vadd.f32 %v2258, %v2418
        %v2420 = vpop.f32.mrb[0].mxu0
        %2421 = vmatprep.mubr.bf16.mxu0 %v810
        %2422 = vmatmul.mubr.bf16.gmra.mrb[0].mxu0 %v809
        %v2423 = vpop.f32.mrb[0].mxu0
        %v2424 = vadd.f32 %v2263, %v2423
        %v2425 = vpop.f32.mrb[0].mxu0
        %v2426 = vpop.f32.mrb[0].mxu0
        %v2427 = vadd.f32 %v2266, %v2426
        %v2428 = vpop.f32.mrb[0].mxu0
        %2429 = vmatprep.mubr.bf16.mxu0 %v815
        %2430 = vmatmul.mubr.bf16.gmra.mrb[0].mxu0 %v814
        %v2431 = vpop.f32.mrb[0].mxu0
        %v2432 = vadd.f32 %v2271, %v2431
        %v2433 = vpop.f32.mrb[0].mxu0
        %v2434 = vpop.f32.mrb[0].mxu0
        %v2435 = vadd.f32 %v2274, %v2434
        %v2436 = vpop.f32.mrb[0].mxu0
        %2437 = vdwg.mxu0
        %2438 = vmatprep.subr.bf16.mxu0 0
        %2439 = vmatpush1.bf16.msra.mxu0 %v1395
        %2440 = vmatprep.subr.bf16.mxu0 0
        %2441 = vmatpush1.bf16.msra.mxu0 %v1398
        %2442 = vmatprep.subr.bf16.mxu0 0
        %2443 = vmatpush1.bf16.msra.mxu0 %v1401
        %2444 = vmatprep.subr.bf16.mxu0 0
        %2445 = vmatpush1.bf16.msra.mxu0 %v1404
        %2446 = vmatprep.subr.bf16.mxu0 0
        %2447 = vmatpush1.bf16.msra.mxu0 %v1407
        %2448 = vmatprep.subr.bf16.mxu0 0
        %2449 = vmatpush1.bf16.msra.mxu0 %v1410
        %2450 = vmatprep.subr.bf16.mxu0 0
        %2451 = vmatpush1.bf16.msra.mxu0 %v1413
        %2452 = vmatprep.subr.bf16.mxu0 0
        %2453 = vmatpush1.bf16.msra.mxu0 %v1416
        %2454 = vmatprep.subr.bf16.mxu0 0
        %2455 = vmatpush1.bf16.msra.mxu0 0
        %2456 = vmatprep.subr.bf16.mxu0 0
        %2457 = vmatpush1.bf16.msra.mxu0 0
        %2458 = vmatprep.subr.bf16.mxu0 0
        %2459 = vmatpush1.bf16.msra.mxu0 0
        %2460 = vmatprep.subr.bf16.mxu0 0
        %2461 = vmatpush1.bf16.msra.mxu0 0
        %2462 = vmatprep.subr.bf16.mxu0 0
        %2463 = vmatpush1.bf16.msra.mxu0 0
        %2464 = vmatprep.subr.bf16.mxu0 0
        %2465 = vmatpush1.bf16.msra.mxu0 0
        %2466 = vmatprep.subr.bf16.mxu0 0
        %2467 = vmatpush1.bf16.msra.mxu0 0
        %2468 = vmatprep.subr.bf16.mxu0 0
        %2469 = vmatpush1.bf16.msra.mxu0 0
        %2470 = vmatprep.mubr.bf16.mxu0 0
        %2471 = vmatmul.mubr.bf16.gmra.mrb[0].mxu0 %v741
        %v2472 = vpop.f32.mrb[0].mxu0
        %v2473 = vadd.f32 %v2312, %v2472
        %v2474 = vpop.f32.mrb[0].mxu0
        %v2475 = vpop.f32.mrb[0].mxu0
        %v2476 = vadd.f32 %v2315, %v2475
        %v2477 = vpop.f32.mrb[0].mxu0
        %2478 = vmatprep.mubr.bf16.mxu0 0
        %2479 = vmatmul.mubr.bf16.gmra.mrb[0].mxu0 %v746
        %v2480 = vpop.f32.mrb[0].mxu0
        %v2481 = vadd.f32 %v2320, %v2480
        %v2482 = vpop.f32.mrb[0].mxu0
        %v2483 = vpop.f32.mrb[0].mxu0
        %v2484 = vadd.f32 %v2323, %v2483
        %v2485 = vpop.f32.mrb[0].mxu0
        %2486 = vmatprep.mubr.bf16.mxu0 0
        %2487 = vmatmul.mubr.bf16.gmra.mrb[0].mxu0 %v751
        %v2488 = vpop.f32.mrb[0].mxu0
        %v2489 = vadd.f32 %v2328, %v2488
        %v2490 = vpop.f32.mrb[0].mxu0
        %v2491 = vpop.f32.mrb[0].mxu0
        %v2492 = vadd.f32 %v2331, %v2491
        %v2493 = vpop.f32.mrb[0].mxu0
        %2494 = vmatprep.mubr.bf16.mxu0 0
        %2495 = vmatmul.mubr.bf16.gmra.mrb[0].mxu0 %v756
        %v2496 = vpop.f32.mrb[0].mxu0
        %v2497 = vadd.f32 %v2336, %v2496
        %v2498 = vpop.f32.mrb[0].mxu0
        %v2499 = vpop.f32.mrb[0].mxu0
        %v2500 = vadd.f32 %v2339, %v2499
        %v2501 = vpop.f32.mrb[0].mxu0
        %2502 = vmatprep.mubr.bf16.mxu0 0
        %2503 = vmatmul.mubr.bf16.gmra.mrb[0].mxu0 %v761
        %v2504 = vpop.f32.mrb[0].mxu0
        %v2505 = vadd.f32 %v2344, %v2504
        %v2506 = vpop.f32.mrb[0].mxu0
        %v2507 = vpop.f32.mrb[0].mxu0
        %v2508 = vadd.f32 %v2347, %v2507
        %v2509 = vpop.f32.mrb[0].mxu0
        %2510 = vmatprep.mubr.bf16.mxu0 0
        %2511 = vmatmul.mubr.bf16.gmra.mrb[0].mxu0 %v766
        %v2512 = vpop.f32.mrb[0].mxu0
        %v2513 = vadd.f32 %v2352, %v2512
        %v2514 = vpop.f32.mrb[0].mxu0
        %v2515 = vpop.f32.mrb[0].mxu0
        %v2516 = vadd.f32 %v2355, %v2515
        %v2517 = vpop.f32.mrb[0].mxu0
        %2518 = vmatprep.mubr.bf16.mxu0 0
        %2519 = vmatmul.mubr.bf16.gmra.mrb[0].mxu0 %v771
        %v2520 = vpop.f32.mrb[0].mxu0
        %v2521 = vadd.f32 %v2360, %v2520
        %v2522 = vpop.f32.mrb[0].mxu0
        %v2523 = vpop.f32.mrb[0].mxu0
        %v2524 = vadd.f32 %v2363, %v2523
        %v2525 = vpop.f32.mrb[0].mxu0
        %2526 = vmatprep.mubr.bf16.mxu0 0
        %2527 = vmatmul.mubr.bf16.gmra.mrb[0].mxu0 %v776
        %v2528 = vpop.f32.mrb[0].mxu0
        %v2529 = vadd.f32 %v2368, %v2528
        %v2530 = vpop.f32.mrb[0].mxu0
        %v2531 = vpop.f32.mrb[0].mxu0
        %v2532 = vadd.f32 %v2371, %v2531
        %v2533 = vpop.f32.mrb[0].mxu0
        %2534 = vmatprep.mubr.bf16.mxu0 0
        %2535 = vmatmul.mubr.bf16.gmra.mrb[0].mxu0 %v781
        %v2536 = vpop.f32.mrb[0].mxu0
        %v2537 = vadd.f32 %v2376, %v2536
        %v2538 = vpop.f32.mrb[0].mxu0
        %v2539 = vpop.f32.mrb[0].mxu0
        %v2540 = vadd.f32 %v2379, %v2539
        %v2541 = vpop.f32.mrb[0].mxu0
        %2542 = vmatprep.mubr.bf16.mxu0 0
        %2543 = vmatmul.mubr.bf16.gmra.mrb[0].mxu0 %v786
        %v2544 = vpop.f32.mrb[0].mxu0
        %v2545 = vadd.f32 %v2384, %v2544
        %v2546 = vpop.f32.mrb[0].mxu0
        %v2547 = vpop.f32.mrb[0].mxu0
        %v2548 = vadd.f32 %v2387, %v2547
        %v2549 = vpop.f32.mrb[0].mxu0
        %2550 = vmatprep.mubr.bf16.mxu0 0
        %2551 = vmatmul.mubr.bf16.gmra.mrb[0].mxu0 %v791
        %v2552 = vpop.f32.mrb[0].mxu0
        %v2553 = vadd.f32 %v2392, %v2552
        %v2554 = vpop.f32.mrb[0].mxu0
        %v2555 = vpop.f32.mrb[0].mxu0
        %v2556 = vadd.f32 %v2395, %v2555
        %v2557 = vpop.f32.mrb[0].mxu0
        %2558 = vmatprep.mubr.bf16.mxu0 0
        %2559 = vmatmul.mubr.bf16.gmra.mrb[0].mxu0 %v796
        %v2560 = vpop.f32.mrb[0].mxu0
        %v2561 = vadd.f32 %v2400, %v2560
        %v2562 = vpop.f32.mrb[0].mxu0
        %v2563 = vpop.f32.mrb[0].mxu0
        %v2564 = vadd.f32 %v2403, %v2563
        %v2565 = vpop.f32.mrb[0].mxu0
        %2566 = vmatprep.mubr.bf16.mxu0 0
        %2567 = vmatmul.mubr.bf16.gmra.mrb[0].mxu0 %v801
        %v2568 = vpop.f32.mrb[0].mxu0
        %v2569 = vadd.f32 %v2408, %v2568
        %v2570 = vpop.f32.mrb[0].mxu0
        %v2571 = vpop.f32.mrb[0].mxu0
        %v2572 = vadd.f32 %v2411, %v2571
        %v2573 = vpop.f32.mrb[0].mxu0
        %2574 = vmatprep.mubr.bf16.mxu0 0
        %2575 = vmatmul.mubr.bf16.gmra.mrb[0].mxu0 %v806
        %v2576 = vpop.f32.mrb[0].mxu0
        %v2577 = vadd.f32 %v2416, %v2576
        %v2578 = vpop.f32.mrb[0].mxu0
        %v2579 = vpop.f32.mrb[0].mxu0
        %v2580 = vadd.f32 %v2419, %v2579
        %v2581 = vpop.f32.mrb[0].mxu0
        %2582 = vmatprep.mubr.bf16.mxu0 0
        %2583 = vmatmul.mubr.bf16.gmra.mrb[0].mxu0 %v811
        %v2584 = vpop.f32.mrb[0].mxu0
        %v2585 = vadd.f32 %v2424, %v2584
        %v2586 = vpop.f32.mrb[0].mxu0
        %v2587 = vpop.f32.mrb[0].mxu0
        %v2588 = vadd.f32 %v2427, %v2587
        %v2589 = vpop.f32.mrb[0].mxu0
        %2590 = vmatprep.mubr.bf16.mxu0 0
        %2591 = vmatmul.mubr.bf16.gmra.mrb[0].mxu0 %v816
        %v2592 = vpop.f32.mrb[0].mxu0
        %v2593 = vadd.f32 %v2432, %v2592
        %v2594 = vpop.f32.mrb[0].mxu0
        %v2595 = vpop.f32.mrb[0].mxu0
        %v2596 = vadd.f32 %v2435, %v2595
        %v2597 = vpop.f32.mrb[0].mxu0
        %2598 = vdwg.mxu0
        %v2599 = vtanh.pop %v1958
        %v2600 = vtanh.pop %v1960
        %v2601 = vtanh.pop %v2473
        %v2602 = vtanh.pop %v1962
        %v2603 = vtanh.pop %v1964
        %v2604 = vtanh.pop %v2476
        %v2605 = vtanh.pop %v1968
        %v2606 = vtanh.pop %v1970
        %v2607 = vtanh.pop %v2481
        %v2608 = vtanh.pop %v1972
        %v2609 = vtanh.pop %v1974
        %v2610 = vtanh.pop %v2484
        %v2611 = vtanh.pop %v1978
        %v2612 = vtanh.pop %v1980
        %v2613 = vtanh.pop %v2489
        %v2614 = vtanh.pop %v1982
        %v2615 = vtanh.pop %v1984
        %v2616 = vtanh.pop %v2492
        %v2617 = vtanh.pop %v1988
        %v2618 = vtanh.pop %v1990
        %v2619 = vtanh.pop %v2497
        %v2620 = vtanh.pop %v1992
        %v2621 = vtanh.pop %v1994
        %v2622 = vtanh.pop %v2500
        %v2623 = vtanh.pop %v1998
        %v2624 = vtanh.pop %v2000
        %v2625 = vtanh.pop %v2505
        %v2626 = vtanh.pop %v2002
        %v2627 = vtanh.pop %v2004
        %v2628 = vtanh.pop %v2508
        %v2629 = vtanh.pop %v2008
        %v2630 = vtanh.pop %v2010
        %v2631 = vtanh.pop %v2513
        %v2632 = vtanh.pop %v2012
        %v2633 = vtanh.pop %v2014
        %v2634 = vtanh.pop %v2516
        %v2635 = vtanh.pop %v2018
        %v2636 = vtanh.pop %v2020
        %v2637 = vtanh.pop %v2521
        %v2638 = vtanh.pop %v2022
        %v2639 = vtanh.pop %v2024
        %v2640 = vtanh.pop %v2524
        %v2641 = vtanh.pop %v2028
        %v2642 = vtanh.pop %v2030
        %v2643 = vtanh.pop %v2529
        %v2644 = vtanh.pop %v2032
        %v2645 = vtanh.pop %v2034
        %v2646 = vtanh.pop %v2532
        %v2647 = vtanh.pop %v2038
        %v2648 = vtanh.pop %v2040
        %v2649 = vtanh.pop %v2537
        %v2650 = vtanh.pop %v2042
        %v2651 = vtanh.pop %v2044
        %v2652 = vtanh.pop %v2540
        %v2653 = vtanh.pop %v2048
        %v2654 = vtanh.pop %v2050
        %v2655 = vtanh.pop %v2545
        %v2656 = vtanh.pop %v2052
        %v2657 = vtanh.pop %v2054
        %v2658 = vtanh.pop %v2548
        %v2659 = vtanh.pop %v2058
        %v2660 = vtanh.pop %v2060
        %v2661 = vtanh.pop %v2553
        %v2662 = vtanh.pop %v2062
        %v2663 = vtanh.pop %v2064
        %v2664 = vtanh.pop %v2556
        %v2665 = vtanh.pop %v2068
        %v2666 = vtanh.pop %v2070
        %v2667 = vtanh.pop %v2561
        %v2668 = vtanh.pop %v2072
        %v2669 = vtanh.pop %v2074
        %v2670 = vtanh.pop %v2564
        %v2671 = vtanh.pop %v2078
        %v2672 = vtanh.pop %v2080
        %v2673 = vtanh.pop %v2569
        %v2674 = vtanh.pop %v2082
        %v2675 = vtanh.pop %v2084
        %v2676 = vtanh.pop %v2572
        %v2677 = vtanh.pop %v2088
        %v2678 = vtanh.pop %v2090
        %v2679 = vtanh.pop %v2577
        %v2680 = vtanh.pop %v2092
        %v2681 = vtanh.pop %v2094
        %v2682 = vtanh.pop %v2580
        %v2683 = vtanh.pop %v2098
        %v2684 = vtanh.pop %v2100
        %v2685 = vtanh.pop %v2585
        %v2686 = vtanh.pop %v2102
        %v2687 = vtanh.pop %v2104
        %v2688 = vtanh.pop %v2588
        %v2689 = vtanh.pop %v2108
        %v2690 = vtanh.pop %v2110
        %v2691 = vtanh.pop %v2593
        %v2692 = vtanh.pop %v2112
        %v2693 = vtanh.pop %v2114
        %v2694 = vtanh.pop %v2596
        %v2695 = vmax.f32 %v2599, %v2600
        %v2696 = vmax.f32 %v2602, %v2603
        %v2697 = vmax.f32 %v2605, %v2606
        %v2698 = vmax.f32 %v2608, %v2609
        %v2699 = vmax.f32 %v2611, %v2612
        %v2700 = vmax.f32 %v2614, %v2615
        %v2701 = vmax.f32 %v2617, %v2618
        %v2702 = vmax.f32 %v2620, %v2621
        %v2703 = vmax.f32 %v2623, %v2624
        %v2704 = vmax.f32 %v2626, %v2627
        %v2705 = vmax.f32 %v2629, %v2630
        %v2706 = vmax.f32 %v2632, %v2633
        %v2707 = vmax.f32 %v2635, %v2636
        %v2708 = vmax.f32 %v2638, %v2639
        %v2709 = vmax.f32 %v2641, %v2642
        %v2710 = vmax.f32 %v2644, %v2645
        %v2711 = vmax.f32 %v2647, %v2648
        %v2712 = vmax.f32 %v2650, %v2651
        %v2713 = vmax.f32 %v2653, %v2654
        %v2714 = vmax.f32 %v2656, %v2657
        %v2715 = vmax.f32 %v2659, %v2660
        %v2716 = vmax.f32 %v2662, %v2663
        %v2717 = vmax.f32 %v2665, %v2666
        %v2718 = vmax.f32 %v2668, %v2669
        %v2719 = vmax.f32 %v2671, %v2672
        %v2720 = vmax.f32 %v2674, %v2675
        %v2721 = vmax.f32 %v2677, %v2678
        %v2722 = vmax.f32 %v2680, %v2681
        %v2723 = vmax.f32 %v2683, %v2684
        %v2724 = vmax.f32 %v2686, %v2687
        %v2725 = vmax.f32 %v2689, %v2690
        %v2726 = vmax.f32 %v2692, %v2693
        %v2727 = vmax.f32 %v2695, %v2601
        %v2728 = vmax.f32 %v2696, %v2604
        %v2729 = vmax.f32 %v2697, %v2607
        %v2730 = vmax.f32 %v2698, %v2610
        %v2731 = vmax.f32 %v2699, %v2613
        %v2732 = vmax.f32 %v2700, %v2616
        %v2733 = vmax.f32 %v2701, %v2619
        %v2734 = vmax.f32 %v2702, %v2622
        %v2735 = vmax.f32 %v2703, %v2625
        %v2736 = vmax.f32 %v2704, %v2628
        %v2737 = vmax.f32 %v2705, %v2631
        %v2738 = vmax.f32 %v2706, %v2634
        %v2739 = vmax.f32 %v2707, %v2637
        %v2740 = vmax.f32 %v2708, %v2640
        %v2741 = vmax.f32 %v2709, %v2643
        %v2742 = vmax.f32 %v2710, %v2646
        %v2743 = vmax.f32 %v2711, %v2649
        %v2744 = vmax.f32 %v2712, %v2652
        %v2745 = vmax.f32 %v2713, %v2655
        %v2746 = vmax.f32 %v2714, %v2658
        %v2747 = vmax.f32 %v2715, %v2661
        %v2748 = vmax.f32 %v2716, %v2664
        %v2749 = vmax.f32 %v2717, %v2667
        %v2750 = vmax.f32 %v2718, %v2670
        %v2751 = vmax.f32 %v2719, %v2673
        %v2752 = vmax.f32 %v2720, %v2676
        %v2753 = vmax.f32 %v2721, %v2679
        %v2754 = vmax.f32 %v2722, %v2682
        %v2755 = vmax.f32 %v2723, %v2685
        %v2756 = vmax.f32 %v2724, %v2688
        %v2757 = vmax.f32 %v2725, %v2691
        %v2758 = vmax.f32 %v2726, %v2694
        %2759 = vst [vmem:[%s204] sm:$0xff] %v2727
        %2760 = vst [vmem:[%s204 + $0x8] sm:$0xff] %v2728
        %2761 = vst [vmem:[%s204 + $0x10] sm:$0xff] %v2729
        %2762 = vst [vmem:[%s204 + $0x18] sm:$0xff] %v2730
        %2763 = vst [vmem:[%s204 + $0x20] sm:$0xff] %v2731
        %2764 = vst [vmem:[%s204 + $0x28] sm:$0xff] %v2732
        %2765 = vst [vmem:[%s204 + $0x30] sm:$0xff] %v2733
        %2766 = vst [vmem:[%s204 + $0x38] sm:$0xff] %v2734
        %2767 = vst [vmem:[%s204 + $0x40] sm:$0xff] %v2735
        %2768 = vst [vmem:[%s204 + $0x48] sm:$0xff] %v2736
        %2769 = vst [vmem:[%s204 + $0x50] sm:$0xff] %v2737
        %2770 = vst [vmem:[%s204 + $0x58] sm:$0xff] %v2738
        %2771 = vst [vmem:[%s204 + $0x60] sm:$0xff] %v2739
        %2772 = vst [vmem:[%s204 + $0x68] sm:$0xff] %v2740
        %2773 = vst [vmem:[%s204 + $0x70] sm:$0xff] %v2741
        %2774 = vst [vmem:[%s204 + $0x78] sm:$0xff] %v2742
        %2775 = vst [vmem:[%s204 + $0x80] sm:$0xff] %v2743
        %2776 = vst [vmem:[%s204 + $0x88] sm:$0xff] %v2744
        %2777 = vst [vmem:[%s204 + $0x90] sm:$0xff] %v2745
        %2778 = vst [vmem:[%s204 + $0x98] sm:$0xff] %v2746
        %2779 = vst [vmem:[%s204 + $0xa0] sm:$0xff] %v2747
        %2780 = vst [vmem:[%s204 + $0xa8] sm:$0xff] %v2748
        %2781 = vst [vmem:[%s204 + $0xb0] sm:$0xff] %v2749
        %2782 = vst [vmem:[%s204 + $0xb8] sm:$0xff] %v2750
        %2783 = vst [vmem:[%s204 + $0xc0] sm:$0xff] %v2751
        %2784 = vst [vmem:[%s204 + $0xc8] sm:$0xff] %v2752
        %2785 = vst [vmem:[%s204 + $0xd0] sm:$0xff] %v2753
        %2786 = vst [vmem:[%s204 + $0xd8] sm:$0xff] %v2754
        %2787 = vst [vmem:[%s204 + $0xe0] sm:$0xff] %v2755
        %2788 = vst [vmem:[%s204 + $0xe8] sm:$0xff] %v2756
        %2789 = vst [vmem:[%s204 + $0xf0] sm:$0xff] %v2757
        %2790 = vst [vmem:[%s204 + $0xf8] sm:$0xff] %v2758
        %s2791 = sand.u32 %s97, 1
        %s2792 = scalar_lea.sflag [#allocation4], %s2791
        %s2793 = sand.u32 %s97, 1
        %s2794 = smul.addr %s2793, 256
        %s2795 = scalar_lea.vmem [#allocation7], %s2794
        // Predicated region
        $region41: #{tpu_custom_call.1} parent=31 // pred_check
          %p2796 = pneg %p107
        $region42: #{tpu_custom_call.1} parent=31 // pred_check_branch
          %2798 = sbr.rel (%p2796) target = $region44
        $region43: #{tpu_custom_call.1} parent=31 // pred_region
          %s2799 = smul.u32 32, %s21
          %s2801 = ssub.s32 4096, 4096
          %2802 = vsyncadd %s2792, %s2801
          %s2803 = smul.addr %s2799, 128
          %s2804 = scalar_lea.hbm %s3, %s2803
          %s2805 = sshll.u32 %s2795, 4
          %s2806 = int_to_ptr.vmem [resolvable:$true] %s2805
          %2811 = dma.vmem_to_hbm [thread:$0]  %s2806, 4096, %s2804, %s2792, 128, 128, 8
        $region44: #{tpu_custom_call.1} parent=31 // pred_fallthru
          _
      $region32: #{tpu_custom_call.1} parent=5 // pred_fallthru
        _
      %p2812 = scmp.le.s32.totalorder 2, %s16
      // Predicated region
      $region45: #{tpu_custom_call.1} parent=5 // pred_check
        %p2813 = pneg %p2812
      $region46: #{tpu_custom_call.1} parent=5 // pred_check_branch
        %2815 = sbr.rel (%p2813) target = $region48
      $region47: #{tpu_custom_call.1} parent=5 // pred_region
        %s2816 = ssub.s32 %s16, 2
        // Predicated region
        $region49: #{tpu_custom_call.1} parent=47 // pred_check
          %p2817 = pneg %p113
        $region50: #{tpu_custom_call.1} parent=47 // pred_check_branch
          %2819 = sbr.rel (%p2817) target = $region52
        $region51: #{tpu_custom_call.1} parent=47 // pred_region
          %s2820 = sand.u32 %s98, 1
          %s2821 = scalar_lea.sflag [#allocation4], %s2820
          %s2822 = sand.u32 %s98, 1
          %s2823 = smul.addr %s2822, 256
          %s2824 = scalar_lea.vmem [#allocation7], %s2823
          %2825 = dma.done %s2821, 4096
        $region52: #{tpu_custom_call.1} parent=47 // pred_fallthru
          _
      $region48: #{tpu_custom_call.1} parent=5 // pred_fallthru
        _
    $region6: #{tpu_custom_call.1} parent=1 // loop_footer
      %s20 = sadd.s32 1, %s16
    $region7: #{tpu_custom_call.1} parent=1 // loop_footer_branch
      %15 = sbr.rel target = $region3
    $region8: #{tpu_custom_call.1} parent=1 // loop_exit
      _
    %2826 = vsyncpa [#allocation3], 1
    %s2827 = scalar_lea.sflag [#allocation3], 1
    %2828 = vsyncpa %s2827, 1
    %2829 = vsyncpa [#allocation6], 1
    %2830 = vsyncpa [#allocation4], 1
    %s2831 = scalar_lea.sflag [#allocation4], 1
    %2832 = vsyncpa %s2831, 1

</llo_original>
